<compile_context>
chip_gen: v7x
topology: tpu7x:2x2x1
jax: 0.10.0
libtpu: 0.0.40
codegen_flags: <defaults>
</compile_context>

<pallas_src>
import functools

import jax
import jax.numpy as jnp
from jax.experimental import pallas as pl
from jax.experimental.pallas import tpu as pltpu


def _gcapcn_kernel(
    x_ref,      # (1, node_dim, M)   f32   X transposed, M = Bt*N
    a_t_ref,    # (1, M, M)          bf16  block-diagonal adjacency, transposed
    sel0_ref,   # (M, Bt*S)          bf16  one-hot selection for switch end 0
    sel1_ref,   # (M, Bt*S)          bf16  one-hot selection for switch end 1
    selm_ref,   # (M, Bt)            bf16  1/N mean-pooling selection
    w0t_ref,    # (n_dim, node_dim)  f32   init_embed weight, transposed
    w_ref,      # (4, n_dim, n_dim)  bf16  [W1Fa^T, W1Fb^T, Wsw_a^T, Wsw_b^T]
    bias_ref,   # (n_dim, 3)         f32   columns [b0, b1f, bsw]
    out_ref,    # (1, n_dim, Bt*(S+1)) f32
    *, Bt, N, S, node_dim, n_dim,
):
    f32 = jnp.float32
    bf16 = jnp.bfloat16

    x = x_ref[0]            # (node_dim, M) f32
    a_t = a_t_ref[0]        # (M, M) bf16
    w0t = w0t_ref[...]      # (n_dim, node_dim) f32
    bias = bias_ref[...]    # (n_dim, 3) f32

    # --- F0^T = W0^T X + b0 : K = node_dim (=3) -> lane-dense VPU FMAs.
    f0_t = bias[:, 0:1] + w0t[:, 0:1] * x[0:1, :]
    for d in range(1, node_dim):
        f0_t = f0_t + w0t[:, d:d + 1] * x[d:d + 1, :]          # (n_dim, M) f32

    # --- L F0 = diag(rowsum(A)) F0 - A F0 (never materialize D or L).
    # rowsum of A == column sums of A^T; 0/1 entries -> exact.
    rowsum = jnp.sum(a_t.astype(f32), axis=0, keepdims=True)   # (1, M)
    f0_bf = f0_t.astype(bf16)
    af0_t = jnp.dot(f0_bf, a_t, preferred_element_type=f32)    # (n_dim, M)
    lf0_t = rowsum * f0_t - af0_t                              # (n_dim, M) f32

    # --- F_final^T = W1Fa^T F0^T + W1Fb^T (L F0)^T + b1f
    #     (W_L_1_G1 and W_F fused in the wrapper; split weights, no concat).
    ff_t = (jnp.dot(w_ref[0], f0_bf, preferred_element_type=f32)
            + jnp.dot(w_ref[1], lf0_t.astype(bf16), preferred_element_type=f32)
            + bias[:, 1:2])                                    # (n_dim, M) f32
    ff_bf = ff_t.astype(bf16)

    # --- switch gather via block-diagonal one-hot selection matmuls,
    #     then the switch encoder with split weights (no lane concat).
    h0_t = jnp.dot(ff_bf, sel0_ref[...], preferred_element_type=f32)  # (n_dim, Bt*S)
    h1_t = jnp.dot(ff_bf, sel1_ref[...], preferred_element_type=f32)
    sw_t = (jnp.dot(w_ref[2], h0_t.astype(bf16), preferred_element_type=f32)
            + jnp.dot(w_ref[3], h1_t.astype(bf16), preferred_element_type=f32)
            + bias[:, 2:3])                                    # (n_dim, Bt*S)

    # --- mean pooling folded onto the MXU via the 1/N selection matrix.
    mean_t = jnp.dot(ff_bf, selm_ref[...], preferred_element_type=f32)  # (n_dim, Bt)

    # --- merged, mostly lane-dense output writeback (one block per step).
    out_ref[0, :, :Bt * S] = sw_t
    out_ref[0, :, Bt * S:] = mean_t


def gcapcn_forward(x, adjacency, switch_bus_map, params, *, target_rows=256):
    """x: (B, N, node_dim) f32; adjacency: (B, N, N) f32;
    switch_bus_map: (S, 2) int32; params from make_params (n_p = n_K = 1)."""
    B, N, node_dim = x.shape
    S = switch_bus_map.shape[0]
    n_dim = params["wf"].shape[1]

    # Batch tile: ~target_rows MXU lanes per grid step.  Keep >= 2 tiles for
    # v7x megacore; raise target_rows on single-TC v5e/v6e to fold the batch.
    Bt = max(1, target_rows // N)
    Bt = min(Bt, B)
    num_tiles = (B + Bt - 1) // Bt
    B_pad = num_tiles * Bt
    if B_pad != B:
        pad = B_pad - B
        x = jnp.pad(x, ((0, pad), (0, 0), (0, 0)))
        adjacency = jnp.pad(adjacency, ((0, pad), (0, 0), (0, 0)))
    M = Bt * N

    # --- X transposed per tile: (num_tiles, node_dim, Bt*N), lane dim = Bt*N.
    x_t = (x.reshape(num_tiles, Bt, N, node_dim)
             .transpose(0, 3, 1, 2)
             .reshape(num_tiles, node_dim, M)).astype(jnp.float32)

    # --- Block-diagonal adjacency per tile, stored TRANSPOSED, bf16 (exact).
    eye = jnp.eye(Bt, dtype=jnp.float32)
    a_tiles = adjacency.reshape(num_tiles, Bt, N, N)
    a_blk_t = (jnp.einsum("bc,tbij->tbjci", eye, a_tiles)
                 .reshape(num_tiles, M, M)
                 .astype(jnp.bfloat16))

    # --- Block-diagonal one-hot / mean selection matrices (transposed layout):
    #     (ff^T @ sel0_t)[:, b*S+s] == f_final[b, switch_bus_map[s, 0], :].
    sel0 = jax.nn.one_hot(switch_bus_map[:, 0], N, dtype=jnp.float32)   # (S, N)
    sel1 = jax.nn.one_hot(switch_bus_map[:, 1], N, dtype=jnp.float32)
    sel0_t = jnp.kron(eye, sel0.T).astype(jnp.bfloat16)                 # (M, Bt*S)
    sel1_t = jnp.kron(eye, sel1.T).astype(jnp.bfloat16)
    selm_t = jnp.kron(eye, jnp.full((N, 1), 1.0 / N, jnp.float32)
                      ).astype(jnp.bfloat16)                            # (M, Bt)

    # --- Fuse W_L_1_G1 with W_F (linear, no activation between them), split
    #     the K = 2*n_dim weights, pre-transpose everything for the kernel.
    w1, wf, wsw = params["w1"], params["wf"], params["wsw"]
    w1f_a = w1[:n_dim] @ wf                              # (n_dim, n_dim) f32
    w1f_b = w1[n_dim:] @ wf
    b1f = params["b1"] @ wf + params["bf"]               # (n_dim,)
    w_stack = jnp.stack(
        [w1f_a.T, w1f_b.T, wsw[:n_dim].T, wsw[n_dim:].T], axis=0
    ).astype(jnp.bfloat16)                               # (4, n_dim, n_dim)
    w0t = params["w0"].T.astype(jnp.float32)             # (n_dim, node_dim)
    bias_t = jnp.stack([params["b0"], b1f, params["bsw"]], axis=1
                       ).astype(jnp.float32)             # (n_dim, 3)

    kernel = functools.partial(_gcapcn_kernel, Bt=Bt, N=N, S=S,
                               node_dim=node_dim, n_dim=n_dim)

    grid_spec = pltpu.PrefetchScalarGridSpec(
        num_scalar_prefetch=0,
        grid=(num_tiles,),
        in_specs=[
            pl.BlockSpec((1, node_dim, M), lambda t: (t, 0, 0)),
            pl.BlockSpec((1, M, M), lambda t: (t, 0, 0)),
            pl.BlockSpec((M, Bt * S), lambda t: (0, 0)),
            pl.BlockSpec((M, Bt * S), lambda t: (0, 0)),
            pl.BlockSpec((M, Bt), lambda t: (0, 0)),
            pl.BlockSpec((n_dim, node_dim), lambda t: (0, 0)),
            pl.BlockSpec((4, n_dim, n_dim), lambda t: (0, 0, 0)),
            pl.BlockSpec((n_dim, 3), lambda t: (0, 0)),
        ],
        out_specs=pl.BlockSpec((1, n_dim, Bt * (S + 1)), lambda t: (t, 0, 0)),
    )

    out = pl.pallas_call(
        kernel,
        out_shape=jax.ShapeDtypeStruct((num_tiles, n_dim, Bt * (S + 1)),
                                       jnp.float32),
        grid_spec=grid_spec,
        compiler_params=pltpu.CompilerParams(
            dimension_semantics=("parallel",)),
    )(x_t, a_blk_t, sel0_t, sel1_t, selm_t, w0t, w_stack, bias_t)

    # Wrapper-side layout plumbing back to module-native shapes.
    sw_t = out[:, :, :Bt * S].reshape(num_tiles, n_dim, Bt, S)
    switch_embeddings = jnp.transpose(sw_t, (0, 2, 3, 1)
                                      ).reshape(B_pad, S, n_dim)[:B]
    pooled = jnp.transpose(out[:, :, Bt * S:], (0, 2, 1)
                           ).reshape(B_pad, n_dim)[:B]
    return switch_embeddings, pooled


def gcapcn_reference(x, adjacency, switch_bus_map, params):
    """Plain-JAX f32 reference mirroring the PyTorch forward."""
    B, N, _ = x.shape
    f0 = x @ params["w0"] + params["b0"]
    rowsum = adjacency.sum(-1)                                   # (B, N)
    D = jnp.eye(N)[None] * rowsum[:, None, :]                    # diag(rowsum)
    L = D - adjacency
    lf0 = jnp.einsum("bij,bjd->bid", L, f0)
    g = jnp.concatenate([f0, lf0], axis=-1) @ params["w1"] + params["b1"]
    f_final = g @ params["wf"] + params["bf"]
    h = jnp.concatenate([f_final[:, switch_bus_map[:, 0], :],
                         f_final[:, switch_bus_map[:, 1], :]], axis=-1)
    sw = h @ params["wsw"] + params["bsw"]
    return sw, f_final.mean(axis=1)


def make_params(key, node_dim=3, n_dim=64, n_p=1, n_K=1):
    """Deterministic Linear params (uniform(-1/sqrt(fan_in), 1/sqrt(fan_in))),
    stored pre-transposed as (in_features, out_features); biases (out_features,).
    The kernel assumes n_p = n_K = 1 (matches the module forward)."""
    def linear(k, fan_in, fan_out):
        kw, kb = jax.random.split(k)
        bound = 1.0 / (fan_in ** 0.5)
        w = jax.random.uniform(kw, (fan_in, fan_out), jnp.float32, -bound, bound)
        b = jax.random.uniform(kb, (fan_out,), jnp.float32, -bound, bound)
        return w, b

    keys = jax.random.split(key, 4)
    w0, b0 = linear(keys[0], node_dim, n_dim * n_p)
    w1, b1 = linear(keys[1], n_dim * (n_K + 1) * n_p, n_dim)
    wf, bf = linear(keys[2], n_dim * n_p, n_dim)
    wsw, bsw = linear(keys[3], 2 * n_dim, n_dim)
    return {"w0": w0, "b0": b0, "w1": w1, "b1": b1,
            "wf": wf, "bf": bf, "wsw": wsw, "bsw": bsw}


if __name__ == "__main__":
    # B=32, N=16 -> Bt=16, M=256 lanes per step, grid=(2,) ("parallel" batch
    # axis keeps both v7x TensorCores busy; raise target_rows on v5e/v6e).
    B, N, node_dim, n_dim, S = 32, 16, 3, 64, 8

    key = jax.random.PRNGKey(0)
    kx, ka, ks, kp = jax.random.split(key, 4)

    x = jax.random.normal(kx, (B, N, node_dim), jnp.float32)
    a_raw = jax.random.uniform(ka, (B, N, N), jnp.float32)
    adjacency = ((a_raw + jnp.swapaxes(a_raw, 1, 2)) > 1.0).astype(jnp.float32)
    adjacency = adjacency * (1.0 - jnp.eye(N)[None])             # no self loops

    # switch_bus_map is an (undeclared) global in the original module:
    # define it deterministically here.
    switch_bus_map = jax.random.randint(ks, (S, 2), 0, N, dtype=jnp.int32)

    params = make_params(kp, node_dim=node_dim, n_dim=n_dim)

    sw_emb, pooled = jax.jit(gcapcn_forward)(x, adjacency, switch_bus_map, params)
    jax.block_until_ready((sw_emb, pooled))

    sw_ref, pooled_ref = gcapcn_reference(x, adjacency, switch_bus_map, params)
    assert sw_emb.shape == (B, S, n_dim) and pooled.shape == (B, n_dim)
    # bf16 MXU operands with f32 accumulation (and fused W1@WF) -> bf16 tolerance.
    assert jnp.allclose(sw_emb, sw_ref, rtol=2e-2, atol=2e-2), \
        float(jnp.max(jnp.abs(sw_emb - sw_ref)))
    assert jnp.allclose(pooled, pooled_ref, rtol=2e-2, atol=2e-2), \
        float(jnp.max(jnp.abs(pooled - pooled_ref)))

    print("KERNEL_OK")
</pallas_src>

<mosaic_0001>
module attributes {stable_mosaic.version = 11 : i64} {
  func.func @_gcapcn_kernel(%arg0: i32, %arg1: memref<1x3x256xf32, #tpu.memory_space<vmem>>, %arg2: memref<1x256x256xbf16, #tpu.memory_space<vmem>>, %arg3: memref<256x128xbf16, #tpu.memory_space<vmem>>, %arg4: memref<256x128xbf16, #tpu.memory_space<vmem>>, %arg5: memref<256x16xbf16, #tpu.memory_space<vmem>>, %arg6: memref<64x3xf32, #tpu.memory_space<vmem>>, %arg7: memref<4x64x64xbf16, #tpu.memory_space<vmem>>, %arg8: memref<64x3xf32, #tpu.memory_space<vmem>>, %arg9: memref<1x64x144xf32, #tpu.memory_space<vmem>>) attributes {dimension_semantics = [#tpu.dimension_semantics<parallel>], iteration_bounds = array<i64: 2>, scalar_prefetch = 0 : i64, scratch_operands = 0 : i64, tpu.core_type = #tpu.core_type<tc>, window_params = [{transform_indices = @transform_0, window_bounds = array<i64: 1, 3, 256>}, {transform_indices = @transform_1, window_bounds = array<i64: 1, 256, 256>}, {pipeline_mode = #tpu.pipeline_mode<synchronous>, transform_indices = @transform_2, window_bounds = array<i64: 256, 128>}, {pipeline_mode = #tpu.pipeline_mode<synchronous>, transform_indices = @transform_3, window_bounds = array<i64: 256, 128>}, {pipeline_mode = #tpu.pipeline_mode<synchronous>, transform_indices = @transform_4, window_bounds = array<i64: 256, 16>}, {pipeline_mode = #tpu.pipeline_mode<synchronous>, transform_indices = @transform_5, window_bounds = array<i64: 64, 3>}, {pipeline_mode = #tpu.pipeline_mode<synchronous>, transform_indices = @transform_6, window_bounds = array<i64: 4, 64, 64>}, {pipeline_mode = #tpu.pipeline_mode<synchronous>, transform_indices = @transform_7, window_bounds = array<i64: 64, 3>}, {transform_indices = @transform_8, window_bounds = array<i64: 1, 64, 144>}]} {
    %c0 = arith.constant 0 : index
    %c0_0 = arith.constant 0 : index
    %c0_1 = arith.constant 0 : index
    %0 = vector.load %arg1[%c0, %c0_0, %c0_1] : memref<1x3x256xf32, #tpu.memory_space<vmem>>, vector<1x3x256xf32>
    %1 = vector.shape_cast %0 : vector<1x3x256xf32> to vector<3x256xf32>
    %c0_2 = arith.constant 0 : index
    %c0_3 = arith.constant 0 : index
    %c0_4 = arith.constant 0 : index
    %2 = vector.load %arg2[%c0_2, %c0_3, %c0_4] : memref<1x256x256xbf16, #tpu.memory_space<vmem>>, vector<1x256x256xbf16>
    %3 = vector.shape_cast %2 : vector<1x256x256xbf16> to vector<256x256xbf16>
    %c0_5 = arith.constant 0 : index
    %c0_6 = arith.constant 0 : index
    %4 = vector.load %arg6[%c0_5, %c0_6] : memref<64x3xf32, #tpu.memory_space<vmem>>, vector<64x3xf32>
    %c0_7 = arith.constant 0 : index
    %c0_8 = arith.constant 0 : index
    %5 = vector.load %arg8[%c0_7, %c0_8] : memref<64x3xf32, #tpu.memory_space<vmem>>, vector<64x3xf32>
    %6 = vector.extract_strided_slice %5 {offsets = [0, 0], sizes = [64, 1], strides = [1, 1]} : vector<64x3xf32> to vector<64x1xf32>
    %7 = vector.extract_strided_slice %4 {offsets = [0, 0], sizes = [64, 1], strides = [1, 1]} : vector<64x3xf32> to vector<64x1xf32>
    %8 = vector.extract_strided_slice %1 {offsets = [0, 0], sizes = [1, 256], strides = [1, 1]} : vector<3x256xf32> to vector<1x256xf32>
    %9 = vector.broadcast %7 : vector<64x1xf32> to vector<64x256xf32>
    %10 = vector.broadcast %8 : vector<1x256xf32> to vector<64x256xf32>
    %11 = arith.mulf %9, %10 : vector<64x256xf32>
    %12 = vector.broadcast %6 : vector<64x1xf32> to vector<64x256xf32>
    %13 = arith.addf %12, %11 : vector<64x256xf32>
    %14 = vector.extract_strided_slice %4 {offsets = [0, 1], sizes = [64, 1], strides = [1, 1]} : vector<64x3xf32> to vector<64x1xf32>
    %15 = vector.extract_strided_slice %1 {offsets = [1, 0], sizes = [1, 256], strides = [1, 1]} : vector<3x256xf32> to vector<1x256xf32>
    %16 = vector.broadcast %14 : vector<64x1xf32> to vector<64x256xf32>
    %17 = vector.broadcast %15 : vector<1x256xf32> to vector<64x256xf32>
    %18 = arith.mulf %16, %17 : vector<64x256xf32>
    %19 = arith.addf %13, %18 : vector<64x256xf32>
    %20 = vector.extract_strided_slice %4 {offsets = [0, 2], sizes = [64, 1], strides = [1, 1]} : vector<64x3xf32> to vector<64x1xf32>
    %21 = vector.extract_strided_slice %1 {offsets = [2, 0], sizes = [1, 256], strides = [1, 1]} : vector<3x256xf32> to vector<1x256xf32>
    %22 = vector.broadcast %20 : vector<64x1xf32> to vector<64x256xf32>
    %23 = vector.broadcast %21 : vector<1x256xf32> to vector<64x256xf32>
    %24 = arith.mulf %22, %23 : vector<64x256xf32>
    %25 = arith.addf %19, %24 : vector<64x256xf32>
    %26 = arith.extf %3 : vector<256x256xbf16> to vector<256x256xf32>
    %cst = arith.constant dense<0.000000e+00> : vector<256xf32>
    %27 = vector.multi_reduction <add>, %26, %cst [0] : vector<256x256xf32> to vector<256xf32>
    %28 = vector.shape_cast %27 : vector<256xf32> to vector<1x256xf32>
    %29 = arith.truncf %25 : vector<64x256xf32> to vector<64x256xbf16>
    %cst_9 = arith.constant dense<0.000000e+00> : vector<64x256xf32>
    %30 = tpu.matmul %29, %3, %cst_9 {dimension_numbers = #tpu.dot_dimension_numbers<[1], [0], [0], [1], [0, 0, 1, 1], [], []>} : vector<64x256xbf16>, vector<256x256xbf16>, vector<64x256xf32> -> vector<64x256xf32>
    %31 = vector.broadcast %28 : vector<1x256xf32> to vector<64x256xf32>
    %32 = arith.mulf %31, %25 : vector<64x256xf32>
    %33 = arith.subf %32, %30 : vector<64x256xf32>
    %c0_10 = arith.constant 0 : index
    %c0_11 = arith.constant 0 : index
    %c0_12 = arith.constant 0 : index
    %34 = vector.load %arg7[%c0_10, %c0_11, %c0_12] : memref<4x64x64xbf16, #tpu.memory_space<vmem>>, vector<1x64x64xbf16>
    %35 = vector.shape_cast %34 : vector<1x64x64xbf16> to vector<64x64xbf16>
    %cst_13 = arith.constant dense<0.000000e+00> : vector<64x256xf32>
    %36 = tpu.matmul %35, %29, %cst_13 {dimension_numbers = #tpu.dot_dimension_numbers<[1], [0], [0], [1], [0, 0, 1, 1], [], []>} : vector<64x64xbf16>, vector<64x256xbf16>, vector<64x256xf32> -> vector<64x256xf32>
    %c1 = arith.constant 1 : index
    %c0_14 = arith.constant 0 : index
    %c0_15 = arith.constant 0 : index
    %37 = vector.load %arg7[%c1, %c0_14, %c0_15] : memref<4x64x64xbf16, #tpu.memory_space<vmem>>, vector<1x64x64xbf16>
    %38 = vector.shape_cast %37 : vector<1x64x64xbf16> to vector<64x64xbf16>
    %39 = arith.truncf %33 : vector<64x256xf32> to vector<64x256xbf16>
    %cst_16 = arith.constant dense<0.000000e+00> : vector<64x256xf32>
    %40 = tpu.matmul %38, %39, %cst_16 {dimension_numbers = #tpu.dot_dimension_numbers<[1], [0], [0], [1], [0, 0, 1, 1], [], []>} : vector<64x64xbf16>, vector<64x256xbf16>, vector<64x256xf32> -> vector<64x256xf32>
    %41 = arith.addf %36, %40 : vector<64x256xf32>
    %42 = vector.extract_strided_slice %5 {offsets = [0, 1], sizes = [64, 1], strides = [1, 1]} : vector<64x3xf32> to vector<64x1xf32>
    %43 = vector.broadcast %42 : vector<64x1xf32> to vector<64x256xf32>
    %44 = arith.addf %41, %43 : vector<64x256xf32>
    %45 = arith.truncf %44 : vector<64x256xf32> to vector<64x256xbf16>
    %c0_17 = arith.constant 0 : index
    %c0_18 = arith.constant 0 : index
    %46 = vector.load %arg3[%c0_17, %c0_18] : memref<256x128xbf16, #tpu.memory_space<vmem>>, vector<256x128xbf16>
    %cst_19 = arith.constant dense<0.000000e+00> : vector<64x128xf32>
    %47 = tpu.matmul %45, %46, %cst_19 {dimension_numbers = #tpu.dot_dimension_numbers<[1], [0], [0], [1], [0, 0, 1, 1], [], []>} : vector<64x256xbf16>, vector<256x128xbf16>, vector<64x128xf32> -> vector<64x128xf32>
    %c0_20 = arith.constant 0 : index
    %c0_21 = arith.constant 0 : index
    %48 = vector.load %arg4[%c0_20, %c0_21] : memref<256x128xbf16, #tpu.memory_space<vmem>>, vector<256x128xbf16>
    %cst_22 = arith.constant dense<0.000000e+00> : vector<64x128xf32>
    %49 = tpu.matmul %45, %48, %cst_22 {dimension_numbers = #tpu.dot_dimension_numbers<[1], [0], [0], [1], [0, 0, 1, 1], [], []>} : vector<64x256xbf16>, vector<256x128xbf16>, vector<64x128xf32> -> vector<64x128xf32>
    %c2 = arith.constant 2 : index
    %c0_23 = arith.constant 0 : index
    %c0_24 = arith.constant 0 : index
    %50 = vector.load %arg7[%c2, %c0_23, %c0_24] : memref<4x64x64xbf16, #tpu.memory_space<vmem>>, vector<1x64x64xbf16>
    %51 = vector.shape_cast %50 : vector<1x64x64xbf16> to vector<64x64xbf16>
    %52 = arith.truncf %47 : vector<64x128xf32> to vector<64x128xbf16>
    %cst_25 = arith.constant dense<0.000000e+00> : vector<64x128xf32>
    %53 = tpu.matmul %51, %52, %cst_25 {dimension_numbers = #tpu.dot_dimension_numbers<[1], [0], [0], [1], [0, 0, 1, 1], [], []>} : vector<64x64xbf16>, vector<64x128xbf16>, vector<64x128xf32> -> vector<64x128xf32>
    %c3 = arith.constant 3 : index
    %c0_26 = arith.constant 0 : index
    %c0_27 = arith.constant 0 : index
    %54 = vector.load %arg7[%c3, %c0_26, %c0_27] : memref<4x64x64xbf16, #tpu.memory_space<vmem>>, vector<1x64x64xbf16>
    %55 = vector.shape_cast %54 : vector<1x64x64xbf16> to vector<64x64xbf16>
    %56 = arith.truncf %49 : vector<64x128xf32> to vector<64x128xbf16>
    %cst_28 = arith.constant dense<0.000000e+00> : vector<64x128xf32>
    %57 = tpu.matmul %55, %56, %cst_28 {dimension_numbers = #tpu.dot_dimension_numbers<[1], [0], [0], [1], [0, 0, 1, 1], [], []>} : vector<64x64xbf16>, vector<64x128xbf16>, vector<64x128xf32> -> vector<64x128xf32>
    %58 = arith.addf %53, %57 : vector<64x128xf32>
    %59 = vector.extract_strided_slice %5 {offsets = [0, 2], sizes = [64, 1], strides = [1, 1]} : vector<64x3xf32> to vector<64x1xf32>
    %60 = vector.broadcast %59 : vector<64x1xf32> to vector<64x128xf32>
    %61 = arith.addf %58, %60 : vector<64x128xf32>
    %c0_29 = arith.constant 0 : index
    %c0_30 = arith.constant 0 : index
    %62 = vector.load %arg5[%c0_29, %c0_30] : memref<256x16xbf16, #tpu.memory_space<vmem>>, vector<256x16xbf16>
    %cst_31 = arith.constant dense<0.000000e+00> : vector<64x16xf32>
    %63 = tpu.matmul %45, %62, %cst_31 {dimension_numbers = #tpu.dot_dimension_numbers<[1], [0], [0], [1], [0, 0, 1, 1], [], []>} : vector<64x256xbf16>, vector<256x16xbf16>, vector<64x16xf32> -> vector<64x16xf32>
    %c0_32 = arith.constant 0 : index
    %c0_33 = arith.constant 0 : index
    %c0_34 = arith.constant 0 : index
    %64 = vector.load %arg9[%c0_32, %c0_33, %c0_34] : memref<1x64x144xf32, #tpu.memory_space<vmem>>, vector<1x64x128xf32>
    %65 = vector.shape_cast %64 : vector<1x64x128xf32> to vector<64x128xf32>
    %66 = vector.shape_cast %61 : vector<64x128xf32> to vector<1x64x128xf32>
    tpu.vector_store %arg9[%c0_32, %c0_33, %c0_34], %66 {strides = array<i32>} : memref<1x64x144xf32, #tpu.memory_space<vmem>>, vector<1x64x128xf32>,
    %c0_35 = arith.constant 0 : index
    %c0_36 = arith.constant 0 : index
    %c128 = arith.constant 128 : index
    %67 = vector.load %arg9[%c0_35, %c0_36, %c128] : memref<1x64x144xf32, #tpu.memory_space<vmem>>, vector<1x64x16xf32>
    %68 = vector.shape_cast %67 : vector<1x64x16xf32> to vector<64x16xf32>
    %69 = vector.shape_cast %63 : vector<64x16xf32> to vector<1x64x16xf32>
    tpu.vector_store %arg9[%c0_35, %c0_36, %c128], %69 {strides = array<i32>} : memref<1x64x144xf32, #tpu.memory_space<vmem>>, vector<1x64x16xf32>,
    return
  }
  func.func @transform_0(%arg0: i32) -> (i32, i32, i32) {
    %c0_i32 = arith.constant 0 : i32
    %c0_i32_0 = arith.constant 0 : i32
    %c0_i32_1 = arith.constant 0 : i32
    return %arg0, %c0_i32, %c0_i32_0 : i32, i32, i32
  }
  func.func @transform_1(%arg0: i32) -> (i32, i32, i32) {
    %c0_i32 = arith.constant 0 : i32
    %c0_i32_0 = arith.constant 0 : i32
    %c0_i32_1 = arith.constant 0 : i32
    return %arg0, %c0_i32, %c0_i32_0 : i32, i32, i32
  }
  func.func @transform_2(%arg0: i32) -> (i32, i32) {
    %c0_i32 = arith.constant 0 : i32
    %c0_i32_0 = arith.constant 0 : i32
    %c0_i32_1 = arith.constant 0 : i32
    return %c0_i32, %c0_i32_0 : i32, i32
  }
  func.func @transform_3(%arg0: i32) -> (i32, i32) {
    %c0_i32 = arith.constant 0 : i32
    %c0_i32_0 = arith.constant 0 : i32
    %c0_i32_1 = arith.constant 0 : i32
    return %c0_i32, %c0_i32_0 : i32, i32
  }
  func.func @transform_4(%arg0: i32) -> (i32, i32) {
    %c0_i32 = arith.constant 0 : i32
    %c0_i32_0 = arith.constant 0 : i32
    %c0_i32_1 = arith.constant 0 : i32
    return %c0_i32, %c0_i32_0 : i32, i32
  }
  func.func @transform_5(%arg0: i32) -> (i32, i32) {
    %c0_i32 = arith.constant 0 : i32
    %c0_i32_0 = arith.constant 0 : i32
    %c0_i32_1 = arith.constant 0 : i32
    return %c0_i32, %c0_i32_0 : i32, i32
  }
  func.func @transform_6(%arg0: i32) -> (i32, i32, i32) {
    %c0_i32 = arith.constant 0 : i32
    %c0_i32_0 = arith.constant 0 : i32
    %c0_i32_1 = arith.constant 0 : i32
    %c0_i32_2 = arith.constant 0 : i32
    return %c0_i32, %c0_i32_0, %c0_i32_1 : i32, i32, i32
  }
  func.func @transform_7(%arg0: i32) -> (i32, i32) {
    %c0_i32 = arith.constant 0 : i32
    %c0_i32_0 = arith.constant 0 : i32
    %c0_i32_1 = arith.constant 0 : i32
    return %c0_i32, %c0_i32_0 : i32, i32
  }
  func.func @transform_8(%arg0: i32) -> (i32, i32, i32) {
    %c0_i32 = arith.constant 0 : i32
    %c0_i32_0 = arith.constant 0 : i32
    %c0_i32_1 = arith.constant 0 : i32
    return %arg0, %c0_i32, %c0_i32_0 : i32, i32, i32
  }
}

</mosaic_0001>

<llo_original>
// kernel: gcapcn_forward.1
$region0: #{gcapcn_forward.1}
  #allocation0 [shape = 'u32[]', space=smem, size = 0x4, offset = 0x4, fixed_abs, tag = 'smem constant byte address 0x4 - core index']
  #allocation1 [shape = 'u32[144,128]{1,0:T(1,128)}', space=vmem, size = 0x12000, scoped, tag = 'internal scratch']
  %s0 = inlined_call_operand.vmem [shape: f32[2,3,256], index: 0, kind: input, shape index: {}]
  %s1 = inlined_call_operand.vmem [shape: bf16[2,256,256], index: 1, kind: input, shape index: {}]
  %s2 = inlined_call_operand.vmem [shape: bf16[256,128], index: 2, kind: input, shape index: {}]
  %s3 = inlined_call_operand.vmem [shape: bf16[256,128], index: 3, kind: input, shape index: {}]
  %s4 = inlined_call_operand.vmem [shape: bf16[256,16], index: 4, kind: input, shape index: {}]
  %s5 = inlined_call_operand.vmem [shape: f32[64,3], index: 5, kind: input, shape index: {}]
  %s6 = inlined_call_operand.vmem [shape: bf16[4,64,64], index: 6, kind: input, shape index: {}]
  %s7 = inlined_call_operand.vmem [shape: f32[64,3], index: 7, kind: input, shape index: {}]
  %s8 = inlined_call_operand.vmem [shape: f32[2,64,144], index: 8, kind: output, shape index: {}]
  %s9 = sld [smem:[#allocation0]]
  $region65: #{gcapcn_forward.1} parent=0
    _
  %s11 = ssub.s32 1, %s9
  %s12 = scalar_select 0, %s11, %s9
  loop: start=0, step=1, limit=4
  $region2: #{gcapcn_forward.1} parent=0 // loop_pre_header
    _
  $region3: #{gcapcn_forward.1} parent=0 // loop_header
    %s14 = sphi 0, %s18
    %p15 = scmp.ge.s32.totalorder %s14, 4
    %s24 = sphi 0, %s26
    %s27 = sphi 0, %s24
    %s28 = sphi 0, %s27
    %s44 = sphi 0, %s28
    %s50 = sphi 0, %s52
    %s53 = sphi 0, %s50
    %s54 = sphi 0, %s53
    %s70 = sphi 0, %s54
    %s74 = sphi 0, %s74
    %s76 = sphi 0, %s74
    %s77 = sphi 0, %s76
    %s91 = sphi 0, %s77
    %s95 = sphi 0, %s95
    %s97 = sphi 0, %s95
    %s98 = sphi 0, %s97
    %s112 = sphi 0, %s98
    %s116 = sphi 0, %s116
    %s118 = sphi 0, %s116
    %s119 = sphi 0, %s118
    %s133 = sphi 0, %s119
    %s137 = sphi 0, %s137
    %s139 = sphi 0, %s137
    %s140 = sphi 0, %s139
    %s154 = sphi 0, %s140
    %s158 = sphi 0, %s158
    %s160 = sphi 0, %s158
    %s161 = sphi 0, %s160
    %s175 = sphi 0, %s161
    %s179 = sphi 0, %s179
    %s181 = sphi 0, %s179
    %s182 = sphi 0, %s181
    %s196 = sphi 0, %s182
    %s202 = sphi 0, %s204
    %s205 = sphi 0, %s202
    %s206 = sphi 0, %s205
    %s222 = sphi 0, %s206
  $region4: #{gcapcn_forward.1} parent=0 // loop_header_branch
    %17 = sbr.rel (%p15) target = $region8
  $region5: #{gcapcn_forward.1} parent=0 // loop_body
    %s19 = ssub.s32 %s14, 1
    %s20 = ssub.s32 %s14, 2
    %s21 = sadd.s32 %s14, 1
    %s22 = ssub.s32 %s14, %s21
    %p23 = scmp.eq.s32.totalorder %s22, 0
    %s25 = sadd.s32 %s24, 1
    %s26 = scalar_select %p23, %s24, %s25
    %p29 = pneg %p23
    %p30 = scmp.eq.s32.totalorder %s14, 1
    %p31 = por %p29, %p30
    %p32 = scmp.ne.s32.totalorder %s24, %s27
    %p33 = scmp.eq.s32.totalorder %s14, 0
    %p34 = por %p32, %p33
    %p35 = scmp.ne.s32.totalorder %s24, %s27
    %p36 = scmp.eq.s32.totalorder %s19, 1
    %p37 = por %p35, %p36
    %p38 = scmp.ne.s32.totalorder %s27, %s28
    %p39 = scmp.eq.s32.totalorder %s19, 0
    %p40 = por %p38, %p39
    %p41 = scmp.ne.s32.totalorder %s27, %s28
    %p42 = scmp.eq.s32.totalorder %s20, 1
    %p43 = por %p41, %p42
    %p45 = scmp.ne.s32.totalorder %s28, %s44
    %p46 = scmp.eq.s32.totalorder %s20, 0
    %p47 = por %p45, %p46
    %s48 = ssub.s32 %s14, %s21
    %p49 = scmp.eq.s32.totalorder %s48, 0
    %s51 = sadd.s32 %s50, 1
    %s52 = scalar_select %p49, %s50, %s51
    %p55 = pneg %p49
    %p56 = scmp.eq.s32.totalorder %s14, 1
    %p57 = por %p55, %p56
    %p58 = scmp.ne.s32.totalorder %s50, %s53
    %p59 = scmp.eq.s32.totalorder %s14, 0
    %p60 = por %p58, %p59
    %p61 = scmp.ne.s32.totalorder %s50, %s53
    %p62 = scmp.eq.s32.totalorder %s19, 1
    %p63 = por %p61, %p62
    %p64 = scmp.ne.s32.totalorder %s53, %s54
    %p65 = scmp.eq.s32.totalorder %s19, 0
    %p66 = por %p64, %p65
    %p67 = scmp.ne.s32.totalorder %s53, %s54
    %p68 = scmp.eq.s32.totalorder %s20, 1
    %p69 = por %p67, %p68
    %p71 = scmp.ne.s32.totalorder %s54, %s70
    %p72 = scmp.eq.s32.totalorder %s20, 0
    %p73 = por %p71, %p72
    %s75 = sadd.s32 %s74, 1
    %p78 = scmp.eq.s32.totalorder %s14, 1
    %p79 = scmp.ne.s32.totalorder %s74, %s76
    %p80 = scmp.eq.s32.totalorder %s14, 0
    %p81 = por %p79, %p80
    %p82 = scmp.ne.s32.totalorder %s74, %s76
    %p83 = scmp.eq.s32.totalorder %s19, 1
    %p84 = por %p82, %p83
    %p85 = scmp.ne.s32.totalorder %s76, %s77
    %p86 = scmp.eq.s32.totalorder %s19, 0
    %p87 = por %p85, %p86
    %p88 = scmp.ne.s32.totalorder %s76, %s77
    %p89 = scmp.eq.s32.totalorder %s20, 1
    %p90 = por %p88, %p89
    %p92 = scmp.ne.s32.totalorder %s77, %s91
    %p93 = scmp.eq.s32.totalorder %s20, 0
    %p94 = por %p92, %p93
    %s96 = sadd.s32 %s95, 1
    %p99 = scmp.eq.s32.totalorder %s14, 1
    %p100 = scmp.ne.s32.totalorder %s95, %s97
    %p101 = scmp.eq.s32.totalorder %s14, 0
    %p102 = por %p100, %p101
    %p103 = scmp.ne.s32.totalorder %s95, %s97
    %p104 = scmp.eq.s32.totalorder %s19, 1
    %p105 = por %p103, %p104
    %p106 = scmp.ne.s32.totalorder %s97, %s98
    %p107 = scmp.eq.s32.totalorder %s19, 0
    %p108 = por %p106, %p107
    %p109 = scmp.ne.s32.totalorder %s97, %s98
    %p110 = scmp.eq.s32.totalorder %s20, 1
    %p111 = por %p109, %p110
    %p113 = scmp.ne.s32.totalorder %s98, %s112
    %p114 = scmp.eq.s32.totalorder %s20, 0
    %p115 = por %p113, %p114
    %s117 = sadd.s32 %s116, 1
    %p120 = scmp.eq.s32.totalorder %s14, 1
    %p121 = scmp.ne.s32.totalorder %s116, %s118
    %p122 = scmp.eq.s32.totalorder %s14, 0
    %p123 = por %p121, %p122
    %p124 = scmp.ne.s32.totalorder %s116, %s118
    %p125 = scmp.eq.s32.totalorder %s19, 1
    %p126 = por %p124, %p125
    %p127 = scmp.ne.s32.totalorder %s118, %s119
    %p128 = scmp.eq.s32.totalorder %s19, 0
    %p129 = por %p127, %p128
    %p130 = scmp.ne.s32.totalorder %s118, %s119
    %p131 = scmp.eq.s32.totalorder %s20, 1
    %p132 = por %p130, %p131
    %p134 = scmp.ne.s32.totalorder %s119, %s133
    %p135 = scmp.eq.s32.totalorder %s20, 0
    %p136 = por %p134, %p135
    %s138 = sadd.s32 %s137, 1
    %p141 = scmp.eq.s32.totalorder %s14, 1
    %p142 = scmp.ne.s32.totalorder %s137, %s139
    %p143 = scmp.eq.s32.totalorder %s14, 0
    %p144 = por %p142, %p143
    %p145 = scmp.ne.s32.totalorder %s137, %s139
    %p146 = scmp.eq.s32.totalorder %s19, 1
    %p147 = por %p145, %p146
    %p148 = scmp.ne.s32.totalorder %s139, %s140
    %p149 = scmp.eq.s32.totalorder %s19, 0
    %p150 = por %p148, %p149
    %p151 = scmp.ne.s32.totalorder %s139, %s140
    %p152 = scmp.eq.s32.totalorder %s20, 1
    %p153 = por %p151, %p152
    %p155 = scmp.ne.s32.totalorder %s140, %s154
    %p156 = scmp.eq.s32.totalorder %s20, 0
    %p157 = por %p155, %p156
    %s159 = sadd.s32 %s158, 1
    %p162 = scmp.eq.s32.totalorder %s14, 1
    %p163 = scmp.ne.s32.totalorder %s158, %s160
    %p164 = scmp.eq.s32.totalorder %s14, 0
    %p165 = por %p163, %p164
    %p166 = scmp.ne.s32.totalorder %s158, %s160
    %p167 = scmp.eq.s32.totalorder %s19, 1
    %p168 = por %p166, %p167
    %p169 = scmp.ne.s32.totalorder %s160, %s161
    %p170 = scmp.eq.s32.totalorder %s19, 0
    %p171 = por %p169, %p170
    %p172 = scmp.ne.s32.totalorder %s160, %s161
    %p173 = scmp.eq.s32.totalorder %s20, 1
    %p174 = por %p172, %p173
    %p176 = scmp.ne.s32.totalorder %s161, %s175
    %p177 = scmp.eq.s32.totalorder %s20, 0
    %p178 = por %p176, %p177
    %s180 = sadd.s32 %s179, 1
    %p183 = scmp.eq.s32.totalorder %s14, 1
    %p184 = scmp.ne.s32.totalorder %s179, %s181
    %p185 = scmp.eq.s32.totalorder %s14, 0
    %p186 = por %p184, %p185
    %p187 = scmp.ne.s32.totalorder %s179, %s181
    %p188 = scmp.eq.s32.totalorder %s19, 1
    %p189 = por %p187, %p188
    %p190 = scmp.ne.s32.totalorder %s181, %s182
    %p191 = scmp.eq.s32.totalorder %s19, 0
    %p192 = por %p190, %p191
    %p193 = scmp.ne.s32.totalorder %s181, %s182
    %p194 = scmp.eq.s32.totalorder %s20, 1
    %p195 = por %p193, %p194
    %p197 = scmp.ne.s32.totalorder %s182, %s196
    %p198 = scmp.eq.s32.totalorder %s20, 0
    %p199 = por %p197, %p198
    %s200 = ssub.s32 %s14, %s21
    %p201 = scmp.eq.s32.totalorder %s200, 0
    %s203 = sadd.s32 %s202, 1
    %s204 = scalar_select %p201, %s202, %s203
    %p207 = pneg %p201
    %p208 = scmp.eq.s32.totalorder %s14, 1
    %p209 = por %p207, %p208
    %p210 = scmp.ne.s32.totalorder %s202, %s205
    %p211 = scmp.eq.s32.totalorder %s14, 0
    %p212 = por %p210, %p211
    %p213 = scmp.ne.s32.totalorder %s202, %s205
    %p214 = scmp.eq.s32.totalorder %s19, 1
    %p215 = por %p213, %p214
    %p216 = scmp.ne.s32.totalorder %s205, %s206
    %p217 = scmp.eq.s32.totalorder %s19, 0
    %p218 = por %p216, %p217
    %p219 = scmp.ne.s32.totalorder %s205, %s206
    %p220 = scmp.eq.s32.totalorder %s20, 1
    %p221 = por %p219, %p220
    %p223 = scmp.ne.s32.totalorder %s206, %s222
    %p224 = scmp.eq.s32.totalorder %s20, 0
    %p225 = por %p223, %p224
    %p226 = scmp.le.s32.totalorder 1, %s14
    %p227 = scmp.lt.s32.totalorder %s14, 3
    %p228 = pnand %p226, %p227
    %p229 = pneg %p228
    // Predicated region
    $region9: #{gcapcn_forward.1} parent=5 // pred_check
      _
    $region10: #{gcapcn_forward.1} parent=5 // pred_check_branch
      %231 = sbr.rel (%p228) target = $region12
    $region11: #{gcapcn_forward.1} parent=5 // pred_region
      %s232 = ssub.s32 %s14, 1
      // Predicated region
      $region13: #{gcapcn_forward.1} parent=11 // pred_check
        %p233 = pneg %p87
      $region14: #{gcapcn_forward.1} parent=11 // pred_check_branch
        %235 = sbr.rel (%p233) target = $region16
      $region15: #{gcapcn_forward.1} parent=11 // pred_region
        _
      $region16: #{gcapcn_forward.1} parent=11 // pred_fallthru
        _
      // Predicated region
      $region17: #{gcapcn_forward.1} parent=11 // pred_check
        %p236 = pneg %p108
      $region18: #{gcapcn_forward.1} parent=11 // pred_check_branch
        %238 = sbr.rel (%p236) target = $region20
      $region19: #{gcapcn_forward.1} parent=11 // pred_region
        _
      $region20: #{gcapcn_forward.1} parent=11 // pred_fallthru
        _
      // Predicated region
      $region21: #{gcapcn_forward.1} parent=11 // pred_check
        %p239 = pneg %p129
      $region22: #{gcapcn_forward.1} parent=11 // pred_check_branch
        %241 = sbr.rel (%p239) target = $region24
      $region23: #{gcapcn_forward.1} parent=11 // pred_region
        _
      $region24: #{gcapcn_forward.1} parent=11 // pred_fallthru
        _
      // Predicated region
      $region25: #{gcapcn_forward.1} parent=11 // pred_check
        %p242 = pneg %p150
      $region26: #{gcapcn_forward.1} parent=11 // pred_check_branch
        %244 = sbr.rel (%p242) target = $region28
      $region27: #{gcapcn_forward.1} parent=11 // pred_region
        _
      $region28: #{gcapcn_forward.1} parent=11 // pred_fallthru
        _
      // Predicated region
      $region29: #{gcapcn_forward.1} parent=11 // pred_check
        %p245 = pneg %p171
      $region30: #{gcapcn_forward.1} parent=11 // pred_check_branch
        %247 = sbr.rel (%p245) target = $region32
      $region31: #{gcapcn_forward.1} parent=11 // pred_region
        _
      $region32: #{gcapcn_forward.1} parent=11 // pred_fallthru
        _
      // Predicated region
      $region33: #{gcapcn_forward.1} parent=11 // pred_check
        %p248 = pneg %p192
      $region34: #{gcapcn_forward.1} parent=11 // pred_check_branch
        %250 = sbr.rel (%p248) target = $region36
      $region35: #{gcapcn_forward.1} parent=11 // pred_region
        _
      $region36: #{gcapcn_forward.1} parent=11 // pred_fallthru
        _
    $region12: #{gcapcn_forward.1} parent=5 // pred_fallthru
      _
    %p251 = scmp.lt.s32.totalorder %s14, 2
    // Predicated region
    $region37: #{gcapcn_forward.1} parent=5 // pred_check
      %p252 = pneg %p251
    $region38: #{gcapcn_forward.1} parent=5 // pred_check_branch
      %254 = sbr.rel (%p252) target = $region40
    $region39: #{gcapcn_forward.1} parent=5 // pred_region
      // Predicated region
      $region41: #{gcapcn_forward.1} parent=39 // pred_check
        %p255 = pneg %p34
      $region42: #{gcapcn_forward.1} parent=39 // pred_check_branch
        %257 = sbr.rel (%p255) target = $region44
      $region43: #{gcapcn_forward.1} parent=39 // pred_region
        %p258 = scmp.lt.s32.totalorder %s14, 1
        %s259 = scalar_select %p258, %s14, 1
        %s260 = smul.addr %s259, 2
        %s261 = smul.addr %s260, 4
        %s262 = scalar_lea.vmem %s0, %s261
      $region44: #{gcapcn_forward.1} parent=39 // pred_fallthru
        _
      // Predicated region
      $region45: #{gcapcn_forward.1} parent=39 // pred_check
        %p263 = pneg %p60
      $region46: #{gcapcn_forward.1} parent=39 // pred_check_branch
        %265 = sbr.rel (%p263) target = $region48
      $region47: #{gcapcn_forward.1} parent=39 // pred_region
        %p266 = scmp.lt.s32.totalorder %s14, 1
        %s267 = scalar_select %p266, %s14, 1
        %s268 = smul.addr %s267, 64
        %s269 = smul.addr %s268, 4
        %s270 = scalar_lea.vmem %s1, %s269
      $region48: #{gcapcn_forward.1} parent=39 // pred_fallthru
        _
    $region40: #{gcapcn_forward.1} parent=5 // pred_fallthru
      _
    %p271 = scmp.le.s32.totalorder 1, %s14
    %p272 = scmp.lt.s32.totalorder %s14, 3
    %p273 = pnand %p271, %p272
    %p274 = pneg %p273
    // Predicated region
    $region49: #{gcapcn_forward.1} parent=5 // pred_check
      _
    $region50: #{gcapcn_forward.1} parent=5 // pred_check_branch
      %276 = sbr.rel (%p273) target = $region52
    $region51: #{gcapcn_forward.1} parent=5 // pred_region
      %s277 = ssub.s32 %s14, 1
      %p278 = scmp.lt.s32.totalorder %s19, 1
      %s279 = scalar_select %p278, %s19, 1
      %s280 = smul.addr %s279, 2
      %s281 = smul.addr %s280, 4
      %s282 = scalar_lea.vmem %s0, %s281
      %p283 = pneg %p40
      %p284 = pneg %p37
      %p285 = scmp.lt.s32.totalorder %s19, 1
      %s286 = scalar_select %p285, %s19, 1
      %s287 = smul.addr %s286, 64
      %s288 = smul.addr %s287, 4
      %s289 = scalar_lea.vmem %s1, %s288
      %p290 = pneg %p66
      %p291 = pneg %p63
      %p292 = pneg %p87
      %p293 = pneg %p84
      %p294 = pneg %p108
      %p295 = pneg %p105
      %p296 = pneg %p129
      %p297 = pneg %p126
      %p298 = pneg %p150
      %p299 = pneg %p147
      %p300 = pneg %p171
      %p301 = pneg %p168
      %p302 = pneg %p192
      %p303 = pneg %p189
      %p304 = pneg %p218
      %p305 = pneg %p215
      %p306 = scmp.lt.s32.totalorder %s19, 1
      %s307 = scalar_select %p306, %s19, 1
      %s308 = smul.addr %s307, 16
      %s309 = smul.addr %s308, 8
      %s310 = scalar_lea.vmem %s8, %s309
      %p311 = scmp.lt.s32.totalorder %s19, 1
      %s312 = scalar_select %p311, %s19, 1
      %s313 = smul.addr %s312, 2
      %s314 = smul.addr %s313, 4
      %s315 = scalar_lea.vmem %s0, %s314
      %p316 = scmp.lt.s32.totalorder %s19, 1
      %s317 = scalar_select %p316, %s19, 1
      %s318 = smul.addr %s317, 64
      %s319 = smul.addr %s318, 4
      %s320 = scalar_lea.vmem %s1, %s319
      %p321 = scmp.lt.s32.totalorder %s19, 1
      %s322 = scalar_select %p321, %s19, 1
      %s323 = smul.addr %s322, 16
      %s324 = smul.addr %s323, 8
      %s325 = scalar_lea.vmem %s8, %s324
      %v327 = vld [vmem:[%s315] sm:$0x77]
      %v328 = vld [vmem:[%s320] sm:$0xff]
      %v329 = vld [vmem:[%s320 + $0x8] sm:$0xff]
      %v330 = vld [vmem:[%s320 + $0x10] sm:$0xff]
      %v331 = vld [vmem:[%s320 + $0x18] sm:$0xff]
      %v332 = vld [vmem:[%s320 + $0x20] sm:$0xff]
      %v333 = vld [vmem:[%s320 + $0x28] sm:$0xff]
      %v334 = vld [vmem:[%s320 + $0x30] sm:$0xff]
      %v335 = vld [vmem:[%s320 + $0x38] sm:$0xff]
      %v336 = vld [vmem:[%s320 + $0x40] sm:$0xff]
      %v337 = vld [vmem:[%s320 + $0x48] sm:$0xff]
      %v338 = vld [vmem:[%s320 + $0x50] sm:$0xff]
      %v339 = vld [vmem:[%s320 + $0x58] sm:$0xff]
      %v340 = vld [vmem:[%s320 + $0x60] sm:$0xff]
      %v341 = vld [vmem:[%s320 + $0x68] sm:$0xff]
      %v342 = vld [vmem:[%s320 + $0x70] sm:$0xff]
      %v343 = vld [vmem:[%s320 + $0x78] sm:$0xff]
      %v344 = vld [vmem:[%s320 + $0x80] sm:$0xff]
      %v345 = vld [vmem:[%s320 + $0x88] sm:$0xff]
      %v346 = vld [vmem:[%s320 + $0x90] sm:$0xff]
      %v347 = vld [vmem:[%s320 + $0x98] sm:$0xff]
      %v348 = vld [vmem:[%s320 + $0xa0] sm:$0xff]
      %v349 = vld [vmem:[%s320 + $0xa8] sm:$0xff]
      %v350 = vld [vmem:[%s320 + $0xb0] sm:$0xff]
      %v351 = vld [vmem:[%s320 + $0xb8] sm:$0xff]
      %v352 = vld [vmem:[%s320 + $0xc0] sm:$0xff]
      %v353 = vld [vmem:[%s320 + $0xc8] sm:$0xff]
      %v354 = vld [vmem:[%s320 + $0xd0] sm:$0xff]
      %v355 = vld [vmem:[%s320 + $0xd8] sm:$0xff]
      %v356 = vld [vmem:[%s320 + $0xe0] sm:$0xff]
      %v357 = vld [vmem:[%s320 + $0xe8] sm:$0xff]
      %v358 = vld [vmem:[%s320 + $0xf0] sm:$0xff]
      %v359 = vld [vmem:[%s320 + $0xf8] sm:$0xff]
      %v360 = vld [vmem:[%s5] sm:$0xff]
      %v361 = vld [vmem:[%s5 + $0x8] sm:$0xff]
      %v362 = vld [vmem:[%s5 + $0x10] sm:$0xff]
      %v363 = vld [vmem:[%s5 + $0x18] sm:$0xff]
      %v364 = vld [vmem:[%s5 + $0x20] sm:$0xff]
      %v365 = vld [vmem:[%s5 + $0x28] sm:$0xff]
      %v366 = vld [vmem:[%s5 + $0x30] sm:$0xff]
      %v367 = vld [vmem:[%s5 + $0x38] sm:$0xff]
      %v368 = vld [vmem:[%s7] sm:$0xff]
      %v369 = vld [vmem:[%s7 + $0x8] sm:$0xff]
      %v370 = vld [vmem:[%s7 + $0x10] sm:$0xff]
      %v371 = vld [vmem:[%s7 + $0x18] sm:$0xff]
      %v372 = vld [vmem:[%s7 + $0x20] sm:$0xff]
      %v373 = vld [vmem:[%s7 + $0x28] sm:$0xff]
      %v374 = vld [vmem:[%s7 + $0x30] sm:$0xff]
      %v375 = vld [vmem:[%s7 + $0x38] sm:$0xff]
      %377 = vset.pattern.permute.xlu0 0
      %378 = vperm.xlu0 %377, %v360
      %v379 = vpop.permute.xlu0 %378
      %382 = vset.pattern.permute.xlu0 0
      %383 = vperm.xlu0 %382, %v361
      %v384 = vpop.permute.xlu0 %383
      %387 = vset.pattern.permute.xlu0 0
      %388 = vperm.xlu0 %387, %v362
      %v389 = vpop.permute.xlu0 %388
      %392 = vset.pattern.permute.xlu0 0
      %393 = vperm.xlu0 %392, %v363
      %v394 = vpop.permute.xlu0 %393
      %397 = vset.pattern.permute.xlu0 0
      %398 = vperm.xlu0 %397, %v364
      %v399 = vpop.permute.xlu0 %398
      %402 = vset.pattern.permute.xlu0 0
      %403 = vperm.xlu0 %402, %v365
      %v404 = vpop.permute.xlu0 %403
      %407 = vset.pattern.permute.xlu0 0
      %408 = vperm.xlu0 %407, %v366
      %v409 = vpop.permute.xlu0 %408
      %412 = vset.pattern.permute.xlu0 0
      %413 = vperm.xlu0 %412, %v367
      %v414 = vpop.permute.xlu0 %413
      %v417 = vlaneseq
      %v418 = vshrl.u32 %v417, 7
      %v419 = vsub.s32 0, %v418
      %v420 = vrot.slane %v327, %v419
      %v421 = vlaneseq
      %v422 = vshrl.u32 %v421, 7
      %v423 = vsub.s32 4, %v422
      %v424 = vrot.slane %v327, %v423
      %v427 = vlaneseq
      %v428 = vshrl.u32 %v427, 7
      %v429 = vsub.s32 0, %v428
      %v430 = vrot.slane %v420, %v429
      %v431 = vlaneseq
      %v432 = vshrl.u32 %v431, 7
      %v433 = vsub.s32 0, %v432
      %v434 = vrot.slane %v424, %v433
      %v435 = vmul.f32 %v379, %v430
      %v436 = vmul.f32 %v379, %v434
      %v437 = vmul.f32 %v384, %v430
      %v438 = vmul.f32 %v384, %v434
      %v439 = vmul.f32 %v389, %v430
      %v440 = vmul.f32 %v389, %v434
      %v441 = vmul.f32 %v394, %v430
      %v442 = vmul.f32 %v394, %v434
      %v443 = vmul.f32 %v399, %v430
      %v444 = vmul.f32 %v399, %v434
      %v445 = vmul.f32 %v404, %v430
      %v446 = vmul.f32 %v404, %v434
      %v447 = vmul.f32 %v409, %v430
      %v448 = vmul.f32 %v409, %v434
      %v449 = vmul.f32 %v414, %v430
      %v450 = vmul.f32 %v414, %v434
      %452 = vset.pattern.permute.xlu0 0
      %453 = vperm.xlu0 %452, %v368
      %v454 = vpop.permute.xlu0 %453
      %457 = vset.pattern.permute.xlu0 0
      %458 = vperm.xlu0 %457, %v369
      %v459 = vpop.permute.xlu0 %458
      %462 = vset.pattern.permute.xlu0 0
      %463 = vperm.xlu0 %462, %v370
      %v464 = vpop.permute.xlu0 %463
      %467 = vset.pattern.permute.xlu0 0
      %468 = vperm.xlu0 %467, %v371
      %v469 = vpop.permute.xlu0 %468
      %472 = vset.pattern.permute.xlu0 0
      %473 = vperm.xlu0 %472, %v372
      %v474 = vpop.permute.xlu0 %473
      %477 = vset.pattern.permute.xlu0 0
      %478 = vperm.xlu0 %477, %v373
      %v479 = vpop.permute.xlu0 %478
      %482 = vset.pattern.permute.xlu0 0
      %483 = vperm.xlu0 %482, %v374
      %v484 = vpop.permute.xlu0 %483
      %487 = vset.pattern.permute.xlu0 0
      %488 = vperm.xlu0 %487, %v375
      %v489 = vpop.permute.xlu0 %488
      %v491 = vadd.f32 %v454, %v435
      %v492 = vadd.f32 %v454, %v436
      %v493 = vadd.f32 %v459, %v437
      %v494 = vadd.f32 %v459, %v438
      %v495 = vadd.f32 %v464, %v439
      %v496 = vadd.f32 %v464, %v440
      %v497 = vadd.f32 %v469, %v441
      %v498 = vadd.f32 %v469, %v442
      %v499 = vadd.f32 %v474, %v443
      %v500 = vadd.f32 %v474, %v444
      %v501 = vadd.f32 %v479, %v445
      %v502 = vadd.f32 %v479, %v446
      %v503 = vadd.f32 %v484, %v447
      %v504 = vadd.f32 %v484, %v448
      %v505 = vadd.f32 %v489, %v449
      %v506 = vadd.f32 %v489, %v450
      %507 = vset.pattern.permute.xlu0 1
      %508 = vperm.xlu0 %507, %v360
      %v509 = vpop.permute.xlu0 %508
      %511 = vset.pattern.permute.xlu0 1
      %512 = vperm.xlu0 %511, %v361
      %v513 = vpop.permute.xlu0 %512
      %515 = vset.pattern.permute.xlu0 1
      %516 = vperm.xlu0 %515, %v362
      %v517 = vpop.permute.xlu0 %516
      %519 = vset.pattern.permute.xlu0 1
      %520 = vperm.xlu0 %519, %v363
      %v521 = vpop.permute.xlu0 %520
      %523 = vset.pattern.permute.xlu0 1
      %524 = vperm.xlu0 %523, %v364
      %v525 = vpop.permute.xlu0 %524
      %527 = vset.pattern.permute.xlu0 1
      %528 = vperm.xlu0 %527, %v365
      %v529 = vpop.permute.xlu0 %528
      %531 = vset.pattern.permute.xlu0 1
      %532 = vperm.xlu0 %531, %v366
      %v533 = vpop.permute.xlu0 %532
      %535 = vset.pattern.permute.xlu0 1
      %536 = vperm.xlu0 %535, %v367
      %v537 = vpop.permute.xlu0 %536
      %v539 = vlaneseq
      %v540 = vshrl.u32 %v539, 7
      %v541 = vsub.s32 1, %v540
      %v542 = vrot.slane %v327, %v541
      %v543 = vlaneseq
      %v544 = vshrl.u32 %v543, 7
      %v545 = vsub.s32 5, %v544
      %v546 = vrot.slane %v327, %v545
      %v549 = vlaneseq
      %v550 = vshrl.u32 %v549, 7
      %v551 = vsub.s32 1, %v550
      %v552 = vrot.slane %v542, %v551
      %v553 = vlaneseq
      %v554 = vshrl.u32 %v553, 7
      %v555 = vsub.s32 1, %v554
      %v556 = vrot.slane %v546, %v555
      %v557 = vmul.f32 %v509, %v552
      %v558 = vmul.f32 %v509, %v556
      %v559 = vmul.f32 %v513, %v552
      %v560 = vmul.f32 %v513, %v556
      %v561 = vmul.f32 %v517, %v552
      %v562 = vmul.f32 %v517, %v556
      %v563 = vmul.f32 %v521, %v552
      %v564 = vmul.f32 %v521, %v556
      %v565 = vmul.f32 %v525, %v552
      %v566 = vmul.f32 %v525, %v556
      %v567 = vmul.f32 %v529, %v552
      %v568 = vmul.f32 %v529, %v556
      %v569 = vmul.f32 %v533, %v552
      %v570 = vmul.f32 %v533, %v556
      %v571 = vmul.f32 %v537, %v552
      %v572 = vmul.f32 %v537, %v556
      %v573 = vadd.f32 %v491, %v557
      %v574 = vadd.f32 %v492, %v558
      %v575 = vadd.f32 %v493, %v559
      %v576 = vadd.f32 %v494, %v560
      %v577 = vadd.f32 %v495, %v561
      %v578 = vadd.f32 %v496, %v562
      %v579 = vadd.f32 %v497, %v563
      %v580 = vadd.f32 %v498, %v564
      %v581 = vadd.f32 %v499, %v565
      %v582 = vadd.f32 %v500, %v566
      %v583 = vadd.f32 %v501, %v567
      %v584 = vadd.f32 %v502, %v568
      %v585 = vadd.f32 %v503, %v569
      %v586 = vadd.f32 %v504, %v570
      %v587 = vadd.f32 %v505, %v571
      %v588 = vadd.f32 %v506, %v572
      %589 = vset.pattern.permute.xlu0 2
      %590 = vperm.xlu0 %589, %v360
      %v591 = vpop.permute.xlu0 %590
      %593 = vset.pattern.permute.xlu0 2
      %594 = vperm.xlu0 %593, %v361
      %v595 = vpop.permute.xlu0 %594
      %597 = vset.pattern.permute.xlu0 2
      %598 = vperm.xlu0 %597, %v362
      %v599 = vpop.permute.xlu0 %598
      %601 = vset.pattern.permute.xlu0 2
      %602 = vperm.xlu0 %601, %v363
      %v603 = vpop.permute.xlu0 %602
      %605 = vset.pattern.permute.xlu0 2
      %606 = vperm.xlu0 %605, %v364
      %v607 = vpop.permute.xlu0 %606
      %609 = vset.pattern.permute.xlu0 2
      %610 = vperm.xlu0 %609, %v365
      %v611 = vpop.permute.xlu0 %610
      %613 = vset.pattern.permute.xlu0 2
      %614 = vperm.xlu0 %613, %v366
      %v615 = vpop.permute.xlu0 %614
      %617 = vset.pattern.permute.xlu0 2
      %618 = vperm.xlu0 %617, %v367
      %v619 = vpop.permute.xlu0 %618
      %v621 = vlaneseq
      %v622 = vshrl.u32 %v621, 7
      %v623 = vsub.s32 2, %v622
      %v624 = vrot.slane %v327, %v623
      %v625 = vlaneseq
      %v626 = vshrl.u32 %v625, 7
      %v627 = vsub.s32 6, %v626
      %v628 = vrot.slane %v327, %v627
      %v631 = vlaneseq
      %v632 = vshrl.u32 %v631, 7
      %v633 = vsub.s32 2, %v632
      %v634 = vrot.slane %v624, %v633
      %v635 = vlaneseq
      %v636 = vshrl.u32 %v635, 7
      %v637 = vsub.s32 2, %v636
      %v638 = vrot.slane %v628, %v637
      %v639 = vmul.f32 %v591, %v634
      %v640 = vmul.f32 %v591, %v638
      %v641 = vmul.f32 %v595, %v634
      %v642 = vmul.f32 %v595, %v638
      %v643 = vmul.f32 %v599, %v634
      %v644 = vmul.f32 %v599, %v638
      %v645 = vmul.f32 %v603, %v634
      %v646 = vmul.f32 %v603, %v638
      %v647 = vmul.f32 %v607, %v634
      %v648 = vmul.f32 %v607, %v638
      %v649 = vmul.f32 %v611, %v634
      %v650 = vmul.f32 %v611, %v638
      %v651 = vmul.f32 %v615, %v634
      %v652 = vmul.f32 %v615, %v638
      %v653 = vmul.f32 %v619, %v634
      %v654 = vmul.f32 %v619, %v638
      %v655 = vadd.f32 %v573, %v639
      %v656 = vadd.f32 %v574, %v640
      %v657 = vadd.f32 %v575, %v641
      %v658 = vadd.f32 %v576, %v642
      %v659 = vadd.f32 %v577, %v643
      %v660 = vadd.f32 %v578, %v644
      %v661 = vadd.f32 %v579, %v645
      %v662 = vadd.f32 %v580, %v646
      %v663 = vadd.f32 %v581, %v647
      %v664 = vadd.f32 %v582, %v648
      %v665 = vadd.f32 %v583, %v649
      %v666 = vadd.f32 %v584, %v650
      %v667 = vadd.f32 %v585, %v651
      %v668 = vadd.f32 %v586, %v652
      %v669 = vadd.f32 %v587, %v653
      %v670 = vadd.f32 %v588, %v654
      %v671 = vunpack.c.l.bf16 %v328
      %v672 = vunpack.c.h.bf16 %v328
      %v673 = vunpack.c.l.bf16 %v329
      %v674 = vunpack.c.h.bf16 %v329
      %v675 = vunpack.c.l.bf16 %v330
      %v676 = vunpack.c.h.bf16 %v330
      %v677 = vunpack.c.l.bf16 %v331
      %v678 = vunpack.c.h.bf16 %v331
      %v679 = vunpack.c.l.bf16 %v332
      %v680 = vunpack.c.h.bf16 %v332
      %v681 = vunpack.c.l.bf16 %v333
      %v682 = vunpack.c.h.bf16 %v333
      %v683 = vunpack.c.l.bf16 %v334
      %v684 = vunpack.c.h.bf16 %v334
      %v685 = vunpack.c.l.bf16 %v335
      %v686 = vunpack.c.h.bf16 %v335
      %v687 = vunpack.c.l.bf16 %v336
      %v688 = vunpack.c.h.bf16 %v336
      %v689 = vunpack.c.l.bf16 %v337
      %v690 = vunpack.c.h.bf16 %v337
      %v691 = vunpack.c.l.bf16 %v338
      %v692 = vunpack.c.h.bf16 %v338
      %v693 = vunpack.c.l.bf16 %v339
      %v694 = vunpack.c.h.bf16 %v339
      %v695 = vunpack.c.l.bf16 %v340
      %v696 = vunpack.c.h.bf16 %v340
      %v697 = vunpack.c.l.bf16 %v341
      %v698 = vunpack.c.h.bf16 %v341
      %v699 = vunpack.c.l.bf16 %v342
      %v700 = vunpack.c.h.bf16 %v342
      %v701 = vunpack.c.l.bf16 %v343
      %v702 = vunpack.c.h.bf16 %v343
      %v703 = vunpack.c.l.bf16 %v344
      %v704 = vunpack.c.h.bf16 %v344
      %v705 = vunpack.c.l.bf16 %v345
      %v706 = vunpack.c.h.bf16 %v345
      %v707 = vunpack.c.l.bf16 %v346
      %v708 = vunpack.c.h.bf16 %v346
      %v709 = vunpack.c.l.bf16 %v347
      %v710 = vunpack.c.h.bf16 %v347
      %v711 = vunpack.c.l.bf16 %v348
      %v712 = vunpack.c.h.bf16 %v348
      %v713 = vunpack.c.l.bf16 %v349
      %v714 = vunpack.c.h.bf16 %v349
      %v715 = vunpack.c.l.bf16 %v350
      %v716 = vunpack.c.h.bf16 %v350
      %v717 = vunpack.c.l.bf16 %v351
      %v718 = vunpack.c.h.bf16 %v351
      %v719 = vunpack.c.l.bf16 %v352
      %v720 = vunpack.c.h.bf16 %v352
      %v721 = vunpack.c.l.bf16 %v353
      %v722 = vunpack.c.h.bf16 %v353
      %v723 = vunpack.c.l.bf16 %v354
      %v724 = vunpack.c.h.bf16 %v354
      %v725 = vunpack.c.l.bf16 %v355
      %v726 = vunpack.c.h.bf16 %v355
      %v727 = vunpack.c.l.bf16 %v356
      %v728 = vunpack.c.h.bf16 %v356
      %v729 = vunpack.c.l.bf16 %v357
      %v730 = vunpack.c.h.bf16 %v357
      %v731 = vunpack.c.l.bf16 %v358
      %v732 = vunpack.c.h.bf16 %v358
      %v733 = vunpack.c.l.bf16 %v359
      %v734 = vunpack.c.h.bf16 %v359
      %v735 = vadd.f32 %v671, %v673
      %v736 = vadd.f32 %v735, %v675
      %v737 = vadd.f32 %v736, %v677
      %v738 = vadd.f32 %v737, %v679
      %v739 = vadd.f32 %v738, %v681
      %v740 = vadd.f32 %v739, %v683
      %v741 = vadd.f32 %v740, %v685
      %v742 = vadd.f32 %v741, %v687
      %v743 = vadd.f32 %v742, %v689
      %v744 = vadd.f32 %v743, %v691
      %v745 = vadd.f32 %v744, %v693
      %v746 = vadd.f32 %v745, %v695
      %v747 = vadd.f32 %v746, %v697
      %v748 = vadd.f32 %v747, %v699
      %v749 = vadd.f32 %v748, %v701
      %v750 = vadd.f32 %v749, %v703
      %v751 = vadd.f32 %v750, %v705
      %v752 = vadd.f32 %v751, %v707
      %v753 = vadd.f32 %v752, %v709
      %v754 = vadd.f32 %v753, %v711
      %v755 = vadd.f32 %v754, %v713
      %v756 = vadd.f32 %v755, %v715
      %v757 = vadd.f32 %v756, %v717
      %v758 = vadd.f32 %v757, %v719
      %v759 = vadd.f32 %v758, %v721
      %v760 = vadd.f32 %v759, %v723
      %v761 = vadd.f32 %v760, %v725
      %v762 = vadd.f32 %v761, %v727
      %v763 = vadd.f32 %v762, %v729
      %v764 = vadd.f32 %v763, %v731
      %v765 = vadd.f32 %v764, %v733
      %v766 = vrot.slane %v765, 4
      %v767 = vadd.f32 %v765, %v766
      %v768 = vrot.slane %v767, 2
      %v769 = vadd.f32 %v767, %v768
      %v770 = vrot.slane %v769, 1
      %v771 = vadd.f32 %v769, %v770
      %v772 = vadd.f32 %v672, %v674
      %v773 = vadd.f32 %v772, %v676
      %v774 = vadd.f32 %v773, %v678
      %v775 = vadd.f32 %v774, %v680
      %v776 = vadd.f32 %v775, %v682
      %v777 = vadd.f32 %v776, %v684
      %v778 = vadd.f32 %v777, %v686
      %v779 = vadd.f32 %v778, %v688
      %v780 = vadd.f32 %v779, %v690
      %v781 = vadd.f32 %v780, %v692
      %v782 = vadd.f32 %v781, %v694
      %v783 = vadd.f32 %v782, %v696
      %v784 = vadd.f32 %v783, %v698
      %v785 = vadd.f32 %v784, %v700
      %v786 = vadd.f32 %v785, %v702
      %v787 = vadd.f32 %v786, %v704
      %v788 = vadd.f32 %v787, %v706
      %v789 = vadd.f32 %v788, %v708
      %v790 = vadd.f32 %v789, %v710
      %v791 = vadd.f32 %v790, %v712
      %v792 = vadd.f32 %v791, %v714
      %v793 = vadd.f32 %v792, %v716
      %v794 = vadd.f32 %v793, %v718
      %v795 = vadd.f32 %v794, %v720
      %v796 = vadd.f32 %v795, %v722
      %v797 = vadd.f32 %v796, %v724
      %v798 = vadd.f32 %v797, %v726
      %v799 = vadd.f32 %v798, %v728
      %v800 = vadd.f32 %v799, %v730
      %v801 = vadd.f32 %v800, %v732
      %v802 = vadd.f32 %v801, %v734
      %v803 = vrot.slane %v802, 4
      %v804 = vadd.f32 %v802, %v803
      %v805 = vrot.slane %v804, 2
      %v806 = vadd.f32 %v804, %v805
      %v807 = vrot.slane %v806, 1
      %v808 = vadd.f32 %v806, %v807
      %v809 = vpack.c.bf16 %v657, %v655
      %v810 = vpack.c.bf16 %v658, %v656
      %v811 = vpack.c.bf16 %v661, %v659
      %v812 = vpack.c.bf16 %v662, %v660
      %v813 = vpack.c.bf16 %v665, %v663
      %v814 = vpack.c.bf16 %v666, %v664
      %v815 = vpack.c.bf16 %v669, %v667
      %v816 = vpack.c.bf16 %v670, %v668
      %v849 = vunpack.c.l.b16 %v328
      %v850 = vunpack.c.h.b16 %v328
      %v851 = vunpack.c.l.b16 %v329
      %v852 = vunpack.c.h.b16 %v329
      %v853 = vunpack.c.l.b16 %v330
      %v854 = vunpack.c.h.b16 %v330
      %v855 = vunpack.c.l.b16 %v331
      %v856 = vunpack.c.h.b16 %v331
      %v857 = vunpack.c.l.b16 %v332
      %v858 = vunpack.c.h.b16 %v332
      %v859 = vunpack.c.l.b16 %v333
      %v860 = vunpack.c.h.b16 %v333
      %v861 = vunpack.c.l.b16 %v334
      %v862 = vunpack.c.h.b16 %v334
      %v863 = vunpack.c.l.b16 %v335
      %v864 = vunpack.c.h.b16 %v335
      %v865 = vunpack.c.l.b16 %v336
      %v866 = vunpack.c.h.b16 %v336
      %v867 = vunpack.c.l.b16 %v337
      %v868 = vunpack.c.h.b16 %v337
      %v869 = vunpack.c.l.b16 %v338
      %v870 = vunpack.c.h.b16 %v338
      %v871 = vunpack.c.l.b16 %v339
      %v872 = vunpack.c.h.b16 %v339
      %v873 = vunpack.c.l.b16 %v340
      %v874 = vunpack.c.h.b16 %v340
      %v875 = vunpack.c.l.b16 %v341
      %v876 = vunpack.c.h.b16 %v341
      %v877 = vunpack.c.l.b16 %v342
      %v878 = vunpack.c.h.b16 %v342
      %v879 = vunpack.c.l.b16 %v343
      %v880 = vunpack.c.h.b16 %v343
      %v881 = vunpack.c.l.b16 %v344
      %v882 = vunpack.c.h.b16 %v344
      %v883 = vunpack.c.l.b16 %v345
      %v884 = vunpack.c.h.b16 %v345
      %v885 = vunpack.c.l.b16 %v346
      %v886 = vunpack.c.h.b16 %v346
      %v887 = vunpack.c.l.b16 %v347
      %v888 = vunpack.c.h.b16 %v347
      %v889 = vunpack.c.l.b16 %v348
      %v890 = vunpack.c.h.b16 %v348
      %v891 = vunpack.c.l.b16 %v349
      %v892 = vunpack.c.h.b16 %v349
      %v893 = vunpack.c.l.b16 %v350
      %v894 = vunpack.c.h.b16 %v350
      %v895 = vunpack.c.l.b16 %v351
      %v896 = vunpack.c.h.b16 %v351
      %v897 = vunpack.c.l.b16 %v352
      %v898 = vunpack.c.h.b16 %v352
      %v899 = vunpack.c.l.b16 %v353
      %v900 = vunpack.c.h.b16 %v353
      %v901 = vunpack.c.l.b16 %v354
      %v902 = vunpack.c.h.b16 %v354
      %v903 = vunpack.c.l.b16 %v355
      %v904 = vunpack.c.h.b16 %v355
      %v905 = vunpack.c.l.b16 %v356
      %v906 = vunpack.c.h.b16 %v356
      %v907 = vunpack.c.l.b16 %v357
      %v908 = vunpack.c.h.b16 %v357
      %v909 = vunpack.c.l.b16 %v358
      %v910 = vunpack.c.h.b16 %v358
      %v911 = vunpack.c.l.b16 %v359
      %v912 = vunpack.c.h.b16 %v359
      %v913 = vpack.c.b16 %v851, %v849
      %v914 = vpack.c.b16 %v852, %v850
      %v915 = vpack.c.b16 %v855, %v853
      %v916 = vpack.c.b16 %v856, %v854
      %v917 = vpack.c.b16 %v859, %v857
      %v918 = vpack.c.b16 %v860, %v858
      %v919 = vpack.c.b16 %v863, %v861
      %v920 = vpack.c.b16 %v864, %v862
      %v921 = vpack.c.b16 %v867, %v865
      %v922 = vpack.c.b16 %v868, %v866
      %v923 = vpack.c.b16 %v871, %v869
      %v924 = vpack.c.b16 %v872, %v870
      %v925 = vpack.c.b16 %v875, %v873
      %v926 = vpack.c.b16 %v876, %v874
      %v927 = vpack.c.b16 %v879, %v877
      %v928 = vpack.c.b16 %v880, %v878
      %v929 = vpack.c.b16 %v883, %v881
      %v930 = vpack.c.b16 %v884, %v882
      %v931 = vpack.c.b16 %v887, %v885
      %v932 = vpack.c.b16 %v888, %v886
      %v933 = vpack.c.b16 %v891, %v889
      %v934 = vpack.c.b16 %v892, %v890
      %v935 = vpack.c.b16 %v895, %v893
      %v936 = vpack.c.b16 %v896, %v894
      %v937 = vpack.c.b16 %v899, %v897
      %v938 = vpack.c.b16 %v900, %v898
      %v939 = vpack.c.b16 %v903, %v901
      %v940 = vpack.c.b16 %v904, %v902
      %v941 = vpack.c.b16 %v907, %v905
      %v942 = vpack.c.b16 %v908, %v906
      %v943 = vpack.c.b16 %v911, %v909
      %v944 = vpack.c.b16 %v912, %v910
      %977 = vmatprep.subr.bf16.mxu0 %v914
      %978 = vmatpush1.bf16.msra.mxu0 %v913
      %979 = vmatprep.subr.bf16.mxu0 %v916
      %980 = vmatpush1.bf16.msra.mxu0 %v915
      %981 = vmatprep.subr.bf16.mxu0 %v918
      %982 = vmatpush1.bf16.msra.mxu0 %v917
      %983 = vmatprep.subr.bf16.mxu0 %v920
      %984 = vmatpush1.bf16.msra.mxu0 %v919
      %985 = vmatprep.subr.bf16.mxu0 %v922
      %986 = vmatpush1.bf16.msra.mxu0 %v921
      %987 = vmatprep.subr.bf16.mxu0 %v924
      %988 = vmatpush1.bf16.msra.mxu0 %v923
      %989 = vmatprep.subr.bf16.mxu0 %v926
      %990 = vmatpush1.bf16.msra.mxu0 %v925
      %991 = vmatprep.subr.bf16.mxu0 %v928
      %992 = vmatpush1.bf16.msra.mxu0 %v927
      %993 = vmatprep.subr.bf16.mxu0 %v930
      %994 = vmatpush1.bf16.msra.mxu0 %v929
      %995 = vmatprep.subr.bf16.mxu0 %v932
      %996 = vmatpush1.bf16.msra.mxu0 %v931
      %997 = vmatprep.subr.bf16.mxu0 %v934
      %998 = vmatpush1.bf16.msra.mxu0 %v933
      %999 = vmatprep.subr.bf16.mxu0 %v936
      %1000 = vmatpush1.bf16.msra.mxu0 %v935
      %1001 = vmatprep.subr.bf16.mxu0 %v938
      %1002 = vmatpush1.bf16.msra.mxu0 %v937
      %1003 = vmatprep.subr.bf16.mxu0 %v940
      %1004 = vmatpush1.bf16.msra.mxu0 %v939
      %1005 = vmatprep.subr.bf16.mxu0 %v942
      %1006 = vmatpush1.bf16.msra.mxu0 %v941
      %1007 = vmatprep.subr.bf16.mxu0 %v944
      %1008 = vmatpush1.bf16.msra.mxu0 %v943
      %1009 = vmatprep.mubr.bf16.mxu0 %v810
      %1010 = vmatmul.mubr.bf16.gmra.mrb[0].mxu0 %v809
      %v1011 = vpop.f32.mrb[0].mxu0
      %v1012 = vadd.f32 0.0, %v1011
      %v1013 = vpop.f32.mrb[0].mxu0
      %v1014 = vadd.f32 0.0, %v1013
      %v1015 = vpop.f32.mrb[0].mxu0
      %v1016 = vadd.f32 0.0, %v1015
      %v1017 = vpop.f32.mrb[0].mxu0
      %v1018 = vadd.f32 0.0, %v1017
      %1019 = vmatprep.mubr.bf16.mxu0 %v812
      %1020 = vmatmul.mubr.bf16.gmra.mrb[0].mxu0 %v811
      %v1021 = vpop.f32.mrb[0].mxu0
      %v1022 = vadd.f32 0.0, %v1021
      %v1023 = vpop.f32.mrb[0].mxu0
      %v1024 = vadd.f32 0.0, %v1023
      %v1025 = vpop.f32.mrb[0].mxu0
      %v1026 = vadd.f32 0.0, %v1025
      %v1027 = vpop.f32.mrb[0].mxu0
      %v1028 = vadd.f32 0.0, %v1027
      %1029 = vmatprep.mubr.bf16.mxu0 %v814
      %1030 = vmatmul.mubr.bf16.gmra.mrb[0].mxu0 %v813
      %v1031 = vpop.f32.mrb[0].mxu0
      %v1032 = vadd.f32 0.0, %v1031
      %v1033 = vpop.f32.mrb[0].mxu0
      %v1034 = vadd.f32 0.0, %v1033
      %v1035 = vpop.f32.mrb[0].mxu0
      %v1036 = vadd.f32 0.0, %v1035
      %v1037 = vpop.f32.mrb[0].mxu0
      %v1038 = vadd.f32 0.0, %v1037
      %1039 = vmatprep.mubr.bf16.mxu0 %v816
      %1040 = vmatmul.mubr.bf16.gmra.mrb[0].mxu0 %v815
      %v1041 = vpop.f32.mrb[0].mxu0
      %v1042 = vadd.f32 0.0, %v1041
      %v1043 = vpop.f32.mrb[0].mxu0
      %v1044 = vadd.f32 0.0, %v1043
      %v1045 = vpop.f32.mrb[0].mxu0
      %v1046 = vadd.f32 0.0, %v1045
      %v1047 = vpop.f32.mrb[0].mxu0
      %v1048 = vadd.f32 0.0, %v1047
      %1049 = vdwg.mxu0
      %v1050 = vmul.f32 %v771, %v655
      %v1051 = vmul.f32 %v808, %v656
      %v1052 = vmul.f32 %v771, %v657
      %v1053 = vmul.f32 %v808, %v658
      %v1054 = vmul.f32 %v771, %v659
      %v1055 = vmul.f32 %v808, %v660
      %v1056 = vmul.f32 %v771, %v661
      %v1057 = vmul.f32 %v808, %v662
      %v1058 = vmul.f32 %v771, %v663
      %v1059 = vmul.f32 %v808, %v664
      %v1060 = vmul.f32 %v771, %v665
      %v1061 = vmul.f32 %v808, %v666
      %v1062 = vmul.f32 %v771, %v667
      %v1063 = vmul.f32 %v808, %v668
      %v1064 = vmul.f32 %v771, %v669
      %v1065 = vmul.f32 %v808, %v670
      %v1066 = vsub.f32 %v1050, %v1012
      %v1067 = vsub.f32 %v1051, %v1014
      %v1068 = vsub.f32 %v1052, %v1016
      %v1069 = vsub.f32 %v1053, %v1018
      %v1070 = vsub.f32 %v1054, %v1022
      %v1071 = vsub.f32 %v1055, %v1024
      %v1072 = vsub.f32 %v1056, %v1026
      %v1073 = vsub.f32 %v1057, %v1028
      %v1074 = vsub.f32 %v1058, %v1032
      %v1075 = vsub.f32 %v1059, %v1034
      %v1076 = vsub.f32 %v1060, %v1036
      %v1077 = vsub.f32 %v1061, %v1038
      %v1078 = vsub.f32 %v1062, %v1042
      %v1079 = vsub.f32 %v1063, %v1044
      %v1080 = vsub.f32 %v1064, %v1046
      %v1081 = vsub.f32 %v1065, %v1048
      %v1082 = vld [vmem:[%s6] sm:$0xf]
      %v1083 = vld [vmem:[%s6 + $0x4] sm:$0xf]
      %v1084 = vld [vmem:[%s6 + $0x8] sm:$0xf]
      %v1085 = vld [vmem:[%s6 + $0xc] sm:$0xf]
      %v1086 = vld [vmem:[%s6 + $0x10] sm:$0xf]
      %v1087 = vld [vmem:[%s6 + $0x14] sm:$0xf]
      %v1088 = vld [vmem:[%s6 + $0x18] sm:$0xf]
      %v1089 = vld [vmem:[%s6 + $0x1c] sm:$0xf]
      %s1090 = scalar_lea.vmem %s6, 32
      %v1091 = vld [vmem:[%s1090] sm:$0xf]
      %v1092 = vld [vmem:[%s1090 + $0x4] sm:$0xf]
      %v1093 = vld [vmem:[%s1090 + $0x8] sm:$0xf]
      %v1094 = vld [vmem:[%s1090 + $0xc] sm:$0xf]
      %v1095 = vld [vmem:[%s1090 + $0x10] sm:$0xf]
      %v1096 = vld [vmem:[%s1090 + $0x14] sm:$0xf]
      %v1097 = vld [vmem:[%s1090 + $0x18] sm:$0xf]
      %v1098 = vld [vmem:[%s1090 + $0x1c] sm:$0xf]
      %v1099 = vpack.c.bf16 %v1068, %v1066
      %v1100 = vpack.c.bf16 %v1069, %v1067
      %v1101 = vpack.c.bf16 %v1072, %v1070
      %v1102 = vpack.c.bf16 %v1073, %v1071
      %v1103 = vpack.c.bf16 %v1076, %v1074
      %v1104 = vpack.c.bf16 %v1077, %v1075
      %v1105 = vpack.c.bf16 %v1080, %v1078
      %v1106 = vpack.c.bf16 %v1081, %v1079
      %v1115 = vunpack.c.l.b16 %v1091
      %v1116 = vunpack.c.l.b16 %v1092
      %v1117 = vunpack.c.l.b16 %v1093
      %v1118 = vunpack.c.l.b16 %v1094
      %v1119 = vunpack.c.l.b16 %v1095
      %v1120 = vunpack.c.l.b16 %v1096
      %v1121 = vunpack.c.l.b16 %v1097
      %v1122 = vunpack.c.l.b16 %v1098
      %v1123 = vpack.c.b16 %v1116, %v1115
      %v1124 = vpack.c.b16 %v1118, %v1117
      %v1125 = vpack.c.b16 %v1120, %v1119
      %v1126 = vpack.c.b16 %v1122, %v1121
      %vm1127 = vcmask 523264
      %v1129 = vsel %vm1127, %v1123, 0
      %v1132 = vsel %vm1127, %v1124, 0
      %v1135 = vsel %vm1127, %v1125, 0
      %v1138 = vsel %vm1127, %v1126, 0
      %1140 = vmatprep.subr.bf16.mxu0 %v1100
      %1141 = vmatpush1.bf16.msra.mxu0 %v1099
      %1142 = vmatprep.subr.bf16.mxu0 %v1102
      %1143 = vmatpush1.bf16.msra.mxu0 %v1101
      %1144 = vmatprep.subr.bf16.mxu0 %v1104
      %1145 = vmatpush1.bf16.msra.mxu0 %v1103
      %1146 = vmatprep.subr.bf16.mxu0 %v1106
      %1147 = vmatpush1.bf16.msra.mxu0 %v1105
      %1148 = vmatprep.subr.bf16.mxu0 0
      %1149 = vmatpush1.bf16.msra.mxu0 0
      %1150 = vmatprep.subr.bf16.mxu0 0
      %1151 = vmatpush1.bf16.msra.mxu0 0
      %1152 = vmatprep.subr.bf16.mxu0 0
      %1153 = vmatpush1.bf16.msra.mxu0 0
      %1154 = vmatprep.subr.bf16.mxu0 0
      %1155 = vmatpush1.bf16.msra.mxu0 0
      %1156 = vmatprep.subr.bf16.mxu0 0
      %1157 = vmatpush1.bf16.msra.mxu0 0
      %1158 = vmatprep.subr.bf16.mxu0 0
      %1159 = vmatpush1.bf16.msra.mxu0 0
      %1160 = vmatprep.subr.bf16.mxu0 0
      %1161 = vmatpush1.bf16.msra.mxu0 0
      %1162 = vmatprep.subr.bf16.mxu0 0
      %1163 = vmatpush1.bf16.msra.mxu0 0
      %1164 = vmatprep.subr.bf16.mxu0 0
      %1165 = vmatpush1.bf16.msra.mxu0 0
      %1166 = vmatprep.subr.bf16.mxu0 0
      %1167 = vmatpush1.bf16.msra.mxu0 0
      %1168 = vmatprep.subr.bf16.mxu0 0
      %1169 = vmatpush1.bf16.msra.mxu0 0
      %1170 = vmatprep.subr.bf16.mxu0 0
      %1171 = vmatpush1.bf16.msra.mxu0 0
      %1172 = vmatprep.mubr.bf16.mxu0 0
      %1173 = vmatmul.mubr.bf16.gmra.mrb[0].mxu0 %v1129
      %v1174 = vpop.f32.mrb[0].mxu0
      %v1175 = vadd.f32 0.0, %v1174
      %v1176 = vpop.f32.mrb[0].mxu0
      %v1177 = vadd.f32 0.0, %v1176
      %v1178 = vpop.f32.mrb[0].mxu0
      %v1179 = vadd.f32 0.0, %v1178
      %v1180 = vpop.f32.mrb[0].mxu0
      %v1181 = vadd.f32 0.0, %v1180
      %1182 = vmatprep.mubr.bf16.mxu0 0
      %1183 = vmatmul.mubr.bf16.gmra.mrb[0].mxu0 %v1132
      %v1184 = vpop.f32.mrb[0].mxu0
      %v1185 = vadd.f32 0.0, %v1184
      %v1186 = vpop.f32.mrb[0].mxu0
      %v1187 = vadd.f32 0.0, %v1186
      %v1188 = vpop.f32.mrb[0].mxu0
      %v1189 = vadd.f32 0.0, %v1188
      %v1190 = vpop.f32.mrb[0].mxu0
      %v1191 = vadd.f32 0.0, %v1190
      %1192 = vmatprep.mubr.bf16.mxu0 0
      %1193 = vmatmul.mubr.bf16.gmra.mrb[0].mxu0 %v1135
      %v1194 = vpop.f32.mrb[0].mxu0
      %v1195 = vadd.f32 0.0, %v1194
      %v1196 = vpop.f32.mrb[0].mxu0
      %v1197 = vadd.f32 0.0, %v1196
      %v1198 = vpop.f32.mrb[0].mxu0
      %v1199 = vadd.f32 0.0, %v1198
      %v1200 = vpop.f32.mrb[0].mxu0
      %v1201 = vadd.f32 0.0, %v1200
      %1202 = vmatprep.mubr.bf16.mxu0 0
      %1203 = vmatmul.mubr.bf16.gmra.mrb[0].mxu0 %v1138
      %v1204 = vpop.f32.mrb[0].mxu0
      %v1205 = vadd.f32 0.0, %v1204
      %v1206 = vpop.f32.mrb[0].mxu0
      %v1207 = vadd.f32 0.0, %v1206
      %v1208 = vpop.f32.mrb[0].mxu0
      %v1209 = vadd.f32 0.0, %v1208
      %v1210 = vpop.f32.mrb[0].mxu0
      %v1211 = vadd.f32 0.0, %v1210
      %1212 = vdwg.mxu0
      %v1221 = vunpack.c.l.b16 %v1082
      %v1222 = vunpack.c.l.b16 %v1083
      %v1223 = vunpack.c.l.b16 %v1084
      %v1224 = vunpack.c.l.b16 %v1085
      %v1225 = vunpack.c.l.b16 %v1086
      %v1226 = vunpack.c.l.b16 %v1087
      %v1227 = vunpack.c.l.b16 %v1088
      %v1228 = vunpack.c.l.b16 %v1089
      %v1229 = vpack.c.b16 %v1222, %v1221
      %v1230 = vpack.c.b16 %v1224, %v1223
      %v1231 = vpack.c.b16 %v1226, %v1225
      %v1232 = vpack.c.b16 %v1228, %v1227
      %v1234 = vsel %vm1127, %v1229, 0
      %v1237 = vsel %vm1127, %v1230, 0
      %v1240 = vsel %vm1127, %v1231, 0
      %v1243 = vsel %vm1127, %v1232, 0
      %1245 = vmatprep.subr.bf16.mxu0 %v810
      %1246 = vmatpush1.bf16.msra.mxu0 %v809
      %1247 = vmatprep.subr.bf16.mxu0 %v812
      %1248 = vmatpush1.bf16.msra.mxu0 %v811
      %1249 = vmatprep.subr.bf16.mxu0 %v814
      %1250 = vmatpush1.bf16.msra.mxu0 %v813
      %1251 = vmatprep.subr.bf16.mxu0 %v816
      %1252 = vmatpush1.bf16.msra.mxu0 %v815
      %1253 = vmatprep.subr.bf16.mxu0 0
      %1254 = vmatpush1.bf16.msra.mxu0 0
      %1255 = vmatprep.subr.bf16.mxu0 0
      %1256 = vmatpush1.bf16.msra.mxu0 0
      %1257 = vmatprep.subr.bf16.mxu0 0
      %1258 = vmatpush1.bf16.msra.mxu0 0
      %1259 = vmatprep.subr.bf16.mxu0 0
      %1260 = vmatpush1.bf16.msra.mxu0 0
      %1261 = vmatprep.subr.bf16.mxu0 0
      %1262 = vmatpush1.bf16.msra.mxu0 0
      %1263 = vmatprep.subr.bf16.mxu0 0
      %1264 = vmatpush1.bf16.msra.mxu0 0
      %1265 = vmatprep.subr.bf16.mxu0 0
      %1266 = vmatpush1.bf16.msra.mxu0 0
      %1267 = vmatprep.subr.bf16.mxu0 0
      %1268 = vmatpush1.bf16.msra.mxu0 0
      %1269 = vmatprep.subr.bf16.mxu0 0
      %1270 = vmatpush1.bf16.msra.mxu0 0
      %1271 = vmatprep.subr.bf16.mxu0 0
      %1272 = vmatpush1.bf16.msra.mxu0 0
      %1273 = vmatprep.subr.bf16.mxu0 0
      %1274 = vmatpush1.bf16.msra.mxu0 0
      %1275 = vmatprep.subr.bf16.mxu0 0
      %1276 = vmatpush1.bf16.msra.mxu0 0
      %1277 = vmatprep.mubr.bf16.mxu0 0
      %1278 = vmatmul.mubr.bf16.gmra.mrb[0].mxu0 %v1234
      %v1279 = vpop.f32.mrb[0].mxu0
      %v1280 = vadd.f32 %v1175, %v1279
      %v1281 = vpop.f32.mrb[0].mxu0
      %v1282 = vadd.f32 %v1177, %v1281
      %v1283 = vpop.f32.mrb[0].mxu0
      %v1284 = vadd.f32 %v1179, %v1283
      %v1285 = vpop.f32.mrb[0].mxu0
      %v1286 = vadd.f32 %v1181, %v1285
      %1287 = vmatprep.mubr.bf16.mxu0 0
      %1288 = vmatmul.mubr.bf16.gmra.mrb[0].mxu0 %v1237
      %v1289 = vpop.f32.mrb[0].mxu0
      %v1290 = vadd.f32 %v1185, %v1289
      %v1291 = vpop.f32.mrb[0].mxu0
      %v1292 = vadd.f32 %v1187, %v1291
      %v1293 = vpop.f32.mrb[0].mxu0
      %v1294 = vadd.f32 %v1189, %v1293
      %v1295 = vpop.f32.mrb[0].mxu0
      %v1296 = vadd.f32 %v1191, %v1295
      %1297 = vmatprep.mubr.bf16.mxu0 0
      %1298 = vmatmul.mubr.bf16.gmra.mrb[0].mxu0 %v1240
      %v1299 = vpop.f32.mrb[0].mxu0
      %v1300 = vadd.f32 %v1195, %v1299
      %v1301 = vpop.f32.mrb[0].mxu0
      %v1302 = vadd.f32 %v1197, %v1301
      %v1303 = vpop.f32.mrb[0].mxu0
      %v1304 = vadd.f32 %v1199, %v1303
      %v1305 = vpop.f32.mrb[0].mxu0
      %v1306 = vadd.f32 %v1201, %v1305
      %1307 = vmatprep.mubr.bf16.mxu0 0
      %1308 = vmatmul.mubr.bf16.gmra.mrb[0].mxu0 %v1243
      %v1309 = vpop.f32.mrb[0].mxu0
      %v1310 = vadd.f32 %v1205, %v1309
      %v1311 = vpop.f32.mrb[0].mxu0
      %v1312 = vadd.f32 %v1207, %v1311
      %v1313 = vpop.f32.mrb[0].mxu0
      %v1314 = vadd.f32 %v1209, %v1313
      %v1315 = vpop.f32.mrb[0].mxu0
      %v1316 = vadd.f32 %v1211, %v1315
      %1317 = vdwg.mxu0
      %1318 = vset.pattern.permute.xlu0 1
      %1319 = vperm.xlu0 %1318, %v368
      %v1320 = vpop.permute.xlu0 %1319
      %1322 = vset.pattern.permute.xlu0 1
      %1323 = vperm.xlu0 %1322, %v369
      %v1324 = vpop.permute.xlu0 %1323
      %1326 = vset.pattern.permute.xlu0 1
      %1327 = vperm.xlu0 %1326, %v370
      %v1328 = vpop.permute.xlu0 %1327
      %1330 = vset.pattern.permute.xlu0 1
      %1331 = vperm.xlu0 %1330, %v371
      %v1332 = vpop.permute.xlu0 %1331
      %1334 = vset.pattern.permute.xlu0 1
      %1335 = vperm.xlu0 %1334, %v372
      %v1336 = vpop.permute.xlu0 %1335
      %1338 = vset.pattern.permute.xlu0 1
      %1339 = vperm.xlu0 %1338, %v373
      %v1340 = vpop.permute.xlu0 %1339
      %1342 = vset.pattern.permute.xlu0 1
      %1343 = vperm.xlu0 %1342, %v374
      %v1344 = vpop.permute.xlu0 %1343
      %1346 = vset.pattern.permute.xlu0 1
      %1347 = vperm.xlu0 %1346, %v375
      %v1348 = vpop.permute.xlu0 %1347
      %v1350 = vadd.f32 %v1280, %v1320
      %v1351 = vadd.f32 %v1282, %v1320
      %v1352 = vadd.f32 %v1284, %v1324
      %v1353 = vadd.f32 %v1286, %v1324
      %v1354 = vadd.f32 %v1290, %v1328
      %v1355 = vadd.f32 %v1292, %v1328
      %v1356 = vadd.f32 %v1294, %v1332
      %v1357 = vadd.f32 %v1296, %v1332
      %v1358 = vadd.f32 %v1300, %v1336
      %v1359 = vadd.f32 %v1302, %v1336
      %v1360 = vadd.f32 %v1304, %v1340
      %v1361 = vadd.f32 %v1306, %v1340
      %v1362 = vadd.f32 %v1310, %v1344
      %v1363 = vadd.f32 %v1312, %v1344
      %v1364 = vadd.f32 %v1314, %v1348
      %v1365 = vadd.f32 %v1316, %v1348
      %v1366 = vpack.c.bf16 %v1352, %v1350
      %v1367 = vpack.c.bf16 %v1353, %v1351
      %v1368 = vpack.c.bf16 %v1356, %v1354
      %v1369 = vpack.c.bf16 %v1357, %v1355
      %v1370 = vpack.c.bf16 %v1360, %v1358
      %v1371 = vpack.c.bf16 %v1361, %v1359
      %v1372 = vpack.c.bf16 %v1364, %v1362
      %v1373 = vpack.c.bf16 %v1365, %v1363
      %v1374 = vld [vmem:[%s2] sm:$0xf]
      %v1375 = vld [vmem:[%s2 + $0x4] sm:$0xf]
      %v1376 = vld [vmem:[%s2 + $0x8] sm:$0xf]
      %v1377 = vld [vmem:[%s2 + $0xc] sm:$0xf]
      %v1378 = vld [vmem:[%s2 + $0x10] sm:$0xf]
      %v1379 = vld [vmem:[%s2 + $0x14] sm:$0xf]
      %v1380 = vld [vmem:[%s2 + $0x18] sm:$0xf]
      %v1381 = vld [vmem:[%s2 + $0x1c] sm:$0xf]
      %v1382 = vld [vmem:[%s2 + $0x20] sm:$0xf]
      %v1383 = vld [vmem:[%s2 + $0x24] sm:$0xf]
      %v1384 = vld [vmem:[%s2 + $0x28] sm:$0xf]
      %v1385 = vld [vmem:[%s2 + $0x2c] sm:$0xf]
      %v1386 = vld [vmem:[%s2 + $0x30] sm:$0xf]
      %v1387 = vld [vmem:[%s2 + $0x34] sm:$0xf]
      %v1388 = vld [vmem:[%s2 + $0x38] sm:$0xf]
      %v1389 = vld [vmem:[%s2 + $0x3c] sm:$0xf]
      %v1390 = vld [vmem:[%s2 + $0x40] sm:$0xf]
      %v1391 = vld [vmem:[%s2 + $0x44] sm:$0xf]
      %v1392 = vld [vmem:[%s2 + $0x48] sm:$0xf]
      %v1393 = vld [vmem:[%s2 + $0x4c] sm:$0xf]
      %v1394 = vld [vmem:[%s2 + $0x50] sm:$0xf]
      %v1395 = vld [vmem:[%s2 + $0x54] sm:$0xf]
      %v1396 = vld [vmem:[%s2 + $0x58] sm:$0xf]
      %v1397 = vld [vmem:[%s2 + $0x5c] sm:$0xf]
      %v1398 = vld [vmem:[%s2 + $0x60] sm:$0xf]
      %v1399 = vld [vmem:[%s2 + $0x64] sm:$0xf]
      %v1400 = vld [vmem:[%s2 + $0x68] sm:$0xf]
      %v1401 = vld [vmem:[%s2 + $0x6c] sm:$0xf]
      %v1402 = vld [vmem:[%s2 + $0x70] sm:$0xf]
      %v1403 = vld [vmem:[%s2 + $0x74] sm:$0xf]
      %v1404 = vld [vmem:[%s2 + $0x78] sm:$0xf]
      %v1405 = vld [vmem:[%s2 + $0x7c] sm:$0xf]
      %v1438 = vunpack.c.l.b16 %v1374
      %v1439 = vunpack.c.l.b16 %v1375
      %v1440 = vunpack.c.l.b16 %v1376
      %v1441 = vunpack.c.l.b16 %v1377
      %v1442 = vunpack.c.l.b16 %v1378
      %v1443 = vunpack.c.l.b16 %v1379
      %v1444 = vunpack.c.l.b16 %v1380
      %v1445 = vunpack.c.l.b16 %v1381
      %v1446 = vunpack.c.l.b16 %v1382
      %v1447 = vunpack.c.l.b16 %v1383
      %v1448 = vunpack.c.l.b16 %v1384
      %v1449 = vunpack.c.l.b16 %v1385
      %v1450 = vunpack.c.l.b16 %v1386
      %v1451 = vunpack.c.l.b16 %v1387
      %v1452 = vunpack.c.l.b16 %v1388
      %v1453 = vunpack.c.l.b16 %v1389
      %v1454 = vunpack.c.l.b16 %v1390
      %v1455 = vunpack.c.l.b16 %v1391
      %v1456 = vunpack.c.l.b16 %v1392
      %v1457 = vunpack.c.l.b16 %v1393
      %v1458 = vunpack.c.l.b16 %v1394
      %v1459 = vunpack.c.l.b16 %v1395
      %v1460 = vunpack.c.l.b16 %v1396
      %v1461 = vunpack.c.l.b16 %v1397
      %v1462 = vunpack.c.l.b16 %v1398
      %v1463 = vunpack.c.l.b16 %v1399
      %v1464 = vunpack.c.l.b16 %v1400
      %v1465 = vunpack.c.l.b16 %v1401
      %v1466 = vunpack.c.l.b16 %v1402
      %v1467 = vunpack.c.l.b16 %v1403
      %v1468 = vunpack.c.l.b16 %v1404
      %v1469 = vunpack.c.l.b16 %v1405
      %v1470 = vpack.c.b16 %v1439, %v1438
      %v1471 = vpack.c.b16 %v1441, %v1440
      %v1472 = vpack.c.b16 %v1443, %v1442
      %v1473 = vpack.c.b16 %v1445, %v1444
      %v1474 = vpack.c.b16 %v1447, %v1446
      %v1475 = vpack.c.b16 %v1449, %v1448
      %v1476 = vpack.c.b16 %v1451, %v1450
      %v1477 = vpack.c.b16 %v1453, %v1452
      %v1478 = vpack.c.b16 %v1455, %v1454
      %v1479 = vpack.c.b16 %v1457, %v1456
      %v1480 = vpack.c.b16 %v1459, %v1458
      %v1481 = vpack.c.b16 %v1461, %v1460
      %v1482 = vpack.c.b16 %v1463, %v1462
      %v1483 = vpack.c.b16 %v1465, %v1464
      %v1484 = vpack.c.b16 %v1467, %v1466
      %v1485 = vpack.c.b16 %v1469, %v1468
      %1502 = vmatprep.subr.bf16.mxu0 0
      %1503 = vmatpush1.bf16.msra.mxu0 %v1470
      %1504 = vmatprep.subr.bf16.mxu0 0
      %1505 = vmatpush1.bf16.msra.mxu0 %v1471
      %1506 = vmatprep.subr.bf16.mxu0 0
      %1507 = vmatpush1.bf16.msra.mxu0 %v1472
      %1508 = vmatprep.subr.bf16.mxu0 0
      %1509 = vmatpush1.bf16.msra.mxu0 %v1473
      %1510 = vmatprep.subr.bf16.mxu0 0
      %1511 = vmatpush1.bf16.msra.mxu0 %v1474
      %1512 = vmatprep.subr.bf16.mxu0 0
      %1513 = vmatpush1.bf16.msra.mxu0 %v1475
      %1514 = vmatprep.subr.bf16.mxu0 0
      %1515 = vmatpush1.bf16.msra.mxu0 %v1476
      %1516 = vmatprep.subr.bf16.mxu0 0
      %1517 = vmatpush1.bf16.msra.mxu0 %v1477
      %1518 = vmatprep.subr.bf16.mxu0 0
      %1519 = vmatpush1.bf16.msra.mxu0 %v1478
      %1520 = vmatprep.subr.bf16.mxu0 0
      %1521 = vmatpush1.bf16.msra.mxu0 %v1479
      %1522 = vmatprep.subr.bf16.mxu0 0
      %1523 = vmatpush1.bf16.msra.mxu0 %v1480
      %1524 = vmatprep.subr.bf16.mxu0 0
      %1525 = vmatpush1.bf16.msra.mxu0 %v1481
      %1526 = vmatprep.subr.bf16.mxu0 0
      %1527 = vmatpush1.bf16.msra.mxu0 %v1482
      %1528 = vmatprep.subr.bf16.mxu0 0
      %1529 = vmatpush1.bf16.msra.mxu0 %v1483
      %1530 = vmatprep.subr.bf16.mxu0 0
      %1531 = vmatpush1.bf16.msra.mxu0 %v1484
      %1532 = vmatprep.subr.bf16.mxu0 0
      %1533 = vmatpush1.bf16.msra.mxu0 %v1485
      %1534 = vmatprep.mubr.bf16.mxu0 %v1367
      %1535 = vmatmul.mubr.bf16.gmra.mrb[0].mxu0 %v1366
      %v1536 = vpop.f32.mrb[0].mxu0
      %v1537 = vadd.f32 0.0, %v1536
      %v1538 = vpop.f32.mrb[0].mxu0
      %v1539 = vpop.f32.mrb[0].mxu0
      %v1540 = vadd.f32 0.0, %v1539
      %v1541 = vpop.f32.mrb[0].mxu0
      %1542 = vmatprep.mubr.bf16.mxu0 %v1369
      %1543 = vmatmul.mubr.bf16.gmra.mrb[0].mxu0 %v1368
      %v1544 = vpop.f32.mrb[0].mxu0
      %v1545 = vadd.f32 0.0, %v1544
      %v1546 = vpop.f32.mrb[0].mxu0
      %v1547 = vpop.f32.mrb[0].mxu0
      %v1548 = vadd.f32 0.0, %v1547
      %v1549 = vpop.f32.mrb[0].mxu0
      %1550 = vmatprep.mubr.bf16.mxu0 %v1371
      %1551 = vmatmul.mubr.bf16.gmra.mrb[0].mxu0 %v1370
      %v1552 = vpop.f32.mrb[0].mxu0
      %v1553 = vadd.f32 0.0, %v1552
      %v1554 = vpop.f32.mrb[0].mxu0
      %v1555 = vpop.f32.mrb[0].mxu0
      %v1556 = vadd.f32 0.0, %v1555
      %v1557 = vpop.f32.mrb[0].mxu0
      %1558 = vmatprep.mubr.bf16.mxu0 %v1373
      %1559 = vmatmul.mubr.bf16.gmra.mrb[0].mxu0 %v1372
      %v1560 = vpop.f32.mrb[0].mxu0
      %v1561 = vadd.f32 0.0, %v1560
      %v1562 = vpop.f32.mrb[0].mxu0
      %v1563 = vpop.f32.mrb[0].mxu0
      %v1564 = vadd.f32 0.0, %v1563
      %v1565 = vpop.f32.mrb[0].mxu0
      %1566 = vdwg.mxu0
      %v1567 = vld [vmem:[%s3] sm:$0xf]
      %v1568 = vld [vmem:[%s3 + $0x4] sm:$0xf]
      %v1569 = vld [vmem:[%s3 + $0x8] sm:$0xf]
      %v1570 = vld [vmem:[%s3 + $0xc] sm:$0xf]
      %v1571 = vld [vmem:[%s3 + $0x10] sm:$0xf]
      %v1572 = vld [vmem:[%s3 + $0x14] sm:$0xf]
      %v1573 = vld [vmem:[%s3 + $0x18] sm:$0xf]
      %v1574 = vld [vmem:[%s3 + $0x1c] sm:$0xf]
      %v1575 = vld [vmem:[%s3 + $0x20] sm:$0xf]
      %v1576 = vld [vmem:[%s3 + $0x24] sm:$0xf]
      %v1577 = vld [vmem:[%s3 + $0x28] sm:$0xf]
      %v1578 = vld [vmem:[%s3 + $0x2c] sm:$0xf]
      %v1579 = vld [vmem:[%s3 + $0x30] sm:$0xf]
      %v1580 = vld [vmem:[%s3 + $0x34] sm:$0xf]
      %v1581 = vld [vmem:[%s3 + $0x38] sm:$0xf]
      %v1582 = vld [vmem:[%s3 + $0x3c] sm:$0xf]
      %v1583 = vld [vmem:[%s3 + $0x40] sm:$0xf]
      %v1584 = vld [vmem:[%s3 + $0x44] sm:$0xf]
      %v1585 = vld [vmem:[%s3 + $0x48] sm:$0xf]
      %v1586 = vld [vmem:[%s3 + $0x4c] sm:$0xf]
      %v1587 = vld [vmem:[%s3 + $0x50] sm:$0xf]
      %v1588 = vld [vmem:[%s3 + $0x54] sm:$0xf]
      %v1589 = vld [vmem:[%s3 + $0x58] sm:$0xf]
      %v1590 = vld [vmem:[%s3 + $0x5c] sm:$0xf]
      %v1591 = vld [vmem:[%s3 + $0x60] sm:$0xf]
      %v1592 = vld [vmem:[%s3 + $0x64] sm:$0xf]
      %v1593 = vld [vmem:[%s3 + $0x68] sm:$0xf]
      %v1594 = vld [vmem:[%s3 + $0x6c] sm:$0xf]
      %v1595 = vld [vmem:[%s3 + $0x70] sm:$0xf]
      %v1596 = vld [vmem:[%s3 + $0x74] sm:$0xf]
      %v1597 = vld [vmem:[%s3 + $0x78] sm:$0xf]
      %v1598 = vld [vmem:[%s3 + $0x7c] sm:$0xf]
      %v1631 = vunpack.c.l.b16 %v1567
      %v1632 = vunpack.c.l.b16 %v1568
      %v1633 = vunpack.c.l.b16 %v1569
      %v1634 = vunpack.c.l.b16 %v1570
      %v1635 = vunpack.c.l.b16 %v1571
      %v1636 = vunpack.c.l.b16 %v1572
      %v1637 = vunpack.c.l.b16 %v1573
      %v1638 = vunpack.c.l.b16 %v1574
      %v1639 = vunpack.c.l.b16 %v1575
      %v1640 = vunpack.c.l.b16 %v1576
      %v1641 = vunpack.c.l.b16 %v1577
      %v1642 = vunpack.c.l.b16 %v1578
      %v1643 = vunpack.c.l.b16 %v1579
      %v1644 = vunpack.c.l.b16 %v1580
      %v1645 = vunpack.c.l.b16 %v1581
      %v1646 = vunpack.c.l.b16 %v1582
      %v1647 = vunpack.c.l.b16 %v1583
      %v1648 = vunpack.c.l.b16 %v1584
      %v1649 = vunpack.c.l.b16 %v1585
      %v1650 = vunpack.c.l.b16 %v1586
      %v1651 = vunpack.c.l.b16 %v1587
      %v1652 = vunpack.c.l.b16 %v1588
      %v1653 = vunpack.c.l.b16 %v1589
      %v1654 = vunpack.c.l.b16 %v1590
      %v1655 = vunpack.c.l.b16 %v1591
      %v1656 = vunpack.c.l.b16 %v1592
      %v1657 = vunpack.c.l.b16 %v1593
      %v1658 = vunpack.c.l.b16 %v1594
      %v1659 = vunpack.c.l.b16 %v1595
      %v1660 = vunpack.c.l.b16 %v1596
      %v1661 = vunpack.c.l.b16 %v1597
      %v1662 = vunpack.c.l.b16 %v1598
      %v1663 = vpack.c.b16 %v1632, %v1631
      %v1664 = vpack.c.b16 %v1634, %v1633
      %v1665 = vpack.c.b16 %v1636, %v1635
      %v1666 = vpack.c.b16 %v1638, %v1637
      %v1667 = vpack.c.b16 %v1640, %v1639
      %v1668 = vpack.c.b16 %v1642, %v1641
      %v1669 = vpack.c.b16 %v1644, %v1643
      %v1670 = vpack.c.b16 %v1646, %v1645
      %v1671 = vpack.c.b16 %v1648, %v1647
      %v1672 = vpack.c.b16 %v1650, %v1649
      %v1673 = vpack.c.b16 %v1652, %v1651
      %v1674 = vpack.c.b16 %v1654, %v1653
      %v1675 = vpack.c.b16 %v1656, %v1655
      %v1676 = vpack.c.b16 %v1658, %v1657
      %v1677 = vpack.c.b16 %v1660, %v1659
      %v1678 = vpack.c.b16 %v1662, %v1661
      %1695 = vmatprep.subr.bf16.mxu0 0
      %1696 = vmatpush1.bf16.msra.mxu0 %v1663
      %1697 = vmatprep.subr.bf16.mxu0 0
      %1698 = vmatpush1.bf16.msra.mxu0 %v1664
      %1699 = vmatprep.subr.bf16.mxu0 0
      %1700 = vmatpush1.bf16.msra.mxu0 %v1665
      %1701 = vmatprep.subr.bf16.mxu0 0
      %1702 = vmatpush1.bf16.msra.mxu0 %v1666
      %1703 = vmatprep.subr.bf16.mxu0 0
      %1704 = vmatpush1.bf16.msra.mxu0 %v1667
      %1705 = vmatprep.subr.bf16.mxu0 0
      %1706 = vmatpush1.bf16.msra.mxu0 %v1668
      %1707 = vmatprep.subr.bf16.mxu0 0
      %1708 = vmatpush1.bf16.msra.mxu0 %v1669
      %1709 = vmatprep.subr.bf16.mxu0 0
      %1710 = vmatpush1.bf16.msra.mxu0 %v1670
      %1711 = vmatprep.subr.bf16.mxu0 0
      %1712 = vmatpush1.bf16.msra.mxu0 %v1671
      %1713 = vmatprep.subr.bf16.mxu0 0
      %1714 = vmatpush1.bf16.msra.mxu0 %v1672
      %1715 = vmatprep.subr.bf16.mxu0 0
      %1716 = vmatpush1.bf16.msra.mxu0 %v1673
      %1717 = vmatprep.subr.bf16.mxu0 0
      %1718 = vmatpush1.bf16.msra.mxu0 %v1674
      %1719 = vmatprep.subr.bf16.mxu0 0
      %1720 = vmatpush1.bf16.msra.mxu0 %v1675
      %1721 = vmatprep.subr.bf16.mxu0 0
      %1722 = vmatpush1.bf16.msra.mxu0 %v1676
      %1723 = vmatprep.subr.bf16.mxu0 0
      %1724 = vmatpush1.bf16.msra.mxu0 %v1677
      %1725 = vmatprep.subr.bf16.mxu0 0
      %1726 = vmatpush1.bf16.msra.mxu0 %v1678
      %1727 = vmatprep.mubr.bf16.mxu0 %v1367
      %1728 = vmatmul.mubr.bf16.gmra.mrb[0].mxu0 %v1366
      %v1729 = vpop.f32.mrb[0].mxu0
      %v1730 = vadd.f32 0.0, %v1729
      %v1731 = vpop.f32.mrb[0].mxu0
      %v1732 = vpop.f32.mrb[0].mxu0
      %v1733 = vadd.f32 0.0, %v1732
      %v1734 = vpop.f32.mrb[0].mxu0
      %1735 = vmatprep.mubr.bf16.mxu0 %v1369
      %1736 = vmatmul.mubr.bf16.gmra.mrb[0].mxu0 %v1368
      %v1737 = vpop.f32.mrb[0].mxu0
      %v1738 = vadd.f32 0.0, %v1737
      %v1739 = vpop.f32.mrb[0].mxu0
      %v1740 = vpop.f32.mrb[0].mxu0
      %v1741 = vadd.f32 0.0, %v1740
      %v1742 = vpop.f32.mrb[0].mxu0
      %1743 = vmatprep.mubr.bf16.mxu0 %v1371
      %1744 = vmatmul.mubr.bf16.gmra.mrb[0].mxu0 %v1370
      %v1745 = vpop.f32.mrb[0].mxu0
      %v1746 = vadd.f32 0.0, %v1745
      %v1747 = vpop.f32.mrb[0].mxu0
      %v1748 = vpop.f32.mrb[0].mxu0
      %v1749 = vadd.f32 0.0, %v1748
      %v1750 = vpop.f32.mrb[0].mxu0
      %1751 = vmatprep.mubr.bf16.mxu0 %v1373
      %1752 = vmatmul.mubr.bf16.gmra.mrb[0].mxu0 %v1372
      %v1753 = vpop.f32.mrb[0].mxu0
      %v1754 = vadd.f32 0.0, %v1753
      %v1755 = vpop.f32.mrb[0].mxu0
      %v1756 = vpop.f32.mrb[0].mxu0
      %v1757 = vadd.f32 0.0, %v1756
      %v1758 = vpop.f32.mrb[0].mxu0
      %1759 = vdwg.mxu0
      %s1760 = scalar_lea.vmem %s6, 64
      %v1761 = vld [vmem:[%s1760] sm:$0xf]
      %v1762 = vld [vmem:[%s1760 + $0x4] sm:$0xf]
      %v1763 = vld [vmem:[%s1760 + $0x8] sm:$0xf]
      %v1764 = vld [vmem:[%s1760 + $0xc] sm:$0xf]
      %v1765 = vld [vmem:[%s1760 + $0x10] sm:$0xf]
      %v1766 = vld [vmem:[%s1760 + $0x14] sm:$0xf]
      %v1767 = vld [vmem:[%s1760 + $0x18] sm:$0xf]
      %v1768 = vld [vmem:[%s1760 + $0x1c] sm:$0xf]
      %v1769 = vpack.c.bf16 %v1540, %v1537
      %v1770 = vpack.c.bf16 %v1548, %v1545
      %v1771 = vpack.c.bf16 %v1556, %v1553
      %v1772 = vpack.c.bf16 %v1564, %v1561
      %s1773 = scalar_lea.vmem %s6, 96
      %v1774 = vld [vmem:[%s1773] sm:$0xf]
      %v1775 = vld [vmem:[%s1773 + $0x4] sm:$0xf]
      %v1776 = vld [vmem:[%s1773 + $0x8] sm:$0xf]
      %v1777 = vld [vmem:[%s1773 + $0xc] sm:$0xf]
      %v1778 = vld [vmem:[%s1773 + $0x10] sm:$0xf]
      %v1779 = vld [vmem:[%s1773 + $0x14] sm:$0xf]
      %v1780 = vld [vmem:[%s1773 + $0x18] sm:$0xf]
      %v1781 = vld [vmem:[%s1773 + $0x1c] sm:$0xf]
      %v1782 = vpack.c.bf16 %v1733, %v1730
      %v1783 = vpack.c.bf16 %v1741, %v1738
      %v1784 = vpack.c.bf16 %v1749, %v1746
      %v1785 = vpack.c.bf16 %v1757, %v1754
      %v1794 = vunpack.c.l.b16 %v1774
      %v1795 = vunpack.c.l.b16 %v1775
      %v1796 = vunpack.c.l.b16 %v1776
      %v1797 = vunpack.c.l.b16 %v1777
      %v1798 = vunpack.c.l.b16 %v1778
      %v1799 = vunpack.c.l.b16 %v1779
      %v1800 = vunpack.c.l.b16 %v1780
      %v1801 = vunpack.c.l.b16 %v1781
      %v1802 = vpack.c.b16 %v1795, %v1794
      %v1803 = vpack.c.b16 %v1797, %v1796
      %v1804 = vpack.c.b16 %v1799, %v1798
      %v1805 = vpack.c.b16 %v1801, %v1800
      %v1807 = vsel %vm1127, %v1802, 0
      %v1810 = vsel %vm1127, %v1803, 0
      %v1813 = vsel %vm1127, %v1804, 0
      %v1816 = vsel %vm1127, %v1805, 0
      %1818 = vmatprep.subr.bf16.mxu0 0
      %1819 = vmatpush1.bf16.msra.mxu0 %v1782
      %1820 = vmatprep.subr.bf16.mxu0 0
      %1821 = vmatpush1.bf16.msra.mxu0 %v1783
      %1822 = vmatprep.subr.bf16.mxu0 0
      %1823 = vmatpush1.bf16.msra.mxu0 %v1784
      %1824 = vmatprep.subr.bf16.mxu0 0
      %1825 = vmatpush1.bf16.msra.mxu0 %v1785
      %1826 = vmatprep.subr.bf16.mxu0 0
      %1827 = vmatpush1.bf16.msra.mxu0 0
      %1828 = vmatprep.subr.bf16.mxu0 0
      %1829 = vmatpush1.bf16.msra.mxu0 0
      %1830 = vmatprep.subr.bf16.mxu0 0
      %1831 = vmatpush1.bf16.msra.mxu0 0
      %1832 = vmatprep.subr.bf16.mxu0 0
      %1833 = vmatpush1.bf16.msra.mxu0 0
      %1834 = vmatprep.subr.bf16.mxu0 0
      %1835 = vmatpush1.bf16.msra.mxu0 0
      %1836 = vmatprep.subr.bf16.mxu0 0
      %1837 = vmatpush1.bf16.msra.mxu0 0
      %1838 = vmatprep.subr.bf16.mxu0 0
      %1839 = vmatpush1.bf16.msra.mxu0 0
      %1840 = vmatprep.subr.bf16.mxu0 0
      %1841 = vmatpush1.bf16.msra.mxu0 0
      %1842 = vmatprep.subr.bf16.mxu0 0
      %1843 = vmatpush1.bf16.msra.mxu0 0
      %1844 = vmatprep.subr.bf16.mxu0 0
      %1845 = vmatpush1.bf16.msra.mxu0 0
      %1846 = vmatprep.subr.bf16.mxu0 0
      %1847 = vmatpush1.bf16.msra.mxu0 0
      %1848 = vmatprep.subr.bf16.mxu0 0
      %1849 = vmatpush1.bf16.msra.mxu0 0
      %1850 = vmatprep.mubr.bf16.mxu0 0
      %1851 = vmatmul.mubr.bf16.gmra.mrb[0].mxu0 %v1807
      %v1852 = vpop.f32.mrb[0].mxu0
      %v1853 = vadd.f32 0.0, %v1852
      %v1854 = vpop.f32.mrb[0].mxu0
      %v1855 = vpop.f32.mrb[0].mxu0
      %v1856 = vadd.f32 0.0, %v1855
      %v1857 = vpop.f32.mrb[0].mxu0
      %1858 = vmatprep.mubr.bf16.mxu0 0
      %1859 = vmatmul.mubr.bf16.gmra.mrb[0].mxu0 %v1810
      %v1860 = vpop.f32.mrb[0].mxu0
      %v1861 = vadd.f32 0.0, %v1860
      %v1862 = vpop.f32.mrb[0].mxu0
      %v1863 = vpop.f32.mrb[0].mxu0
      %v1864 = vadd.f32 0.0, %v1863
      %v1865 = vpop.f32.mrb[0].mxu0
      %1866 = vmatprep.mubr.bf16.mxu0 0
      %1867 = vmatmul.mubr.bf16.gmra.mrb[0].mxu0 %v1813
      %v1868 = vpop.f32.mrb[0].mxu0
      %v1869 = vadd.f32 0.0, %v1868
      %v1870 = vpop.f32.mrb[0].mxu0
      %v1871 = vpop.f32.mrb[0].mxu0
      %v1872 = vadd.f32 0.0, %v1871
      %v1873 = vpop.f32.mrb[0].mxu0
      %1874 = vmatprep.mubr.bf16.mxu0 0
      %1875 = vmatmul.mubr.bf16.gmra.mrb[0].mxu0 %v1816
      %v1876 = vpop.f32.mrb[0].mxu0
      %v1877 = vadd.f32 0.0, %v1876
      %v1878 = vpop.f32.mrb[0].mxu0
      %v1879 = vpop.f32.mrb[0].mxu0
      %v1880 = vadd.f32 0.0, %v1879
      %v1881 = vpop.f32.mrb[0].mxu0
      %1882 = vdwg.mxu0
      %v1891 = vunpack.c.l.b16 %v1761
      %v1892 = vunpack.c.l.b16 %v1762
      %v1893 = vunpack.c.l.b16 %v1763
      %v1894 = vunpack.c.l.b16 %v1764
      %v1895 = vunpack.c.l.b16 %v1765
      %v1896 = vunpack.c.l.b16 %v1766
      %v1897 = vunpack.c.l.b16 %v1767
      %v1898 = vunpack.c.l.b16 %v1768
      %v1899 = vpack.c.b16 %v1892, %v1891
      %v1900 = vpack.c.b16 %v1894, %v1893
      %v1901 = vpack.c.b16 %v1896, %v1895
      %v1902 = vpack.c.b16 %v1898, %v1897
      %v1904 = vsel %vm1127, %v1899, 0
      %v1907 = vsel %vm1127, %v1900, 0
      %v1910 = vsel %vm1127, %v1901, 0
      %v1913 = vsel %vm1127, %v1902, 0
      %1915 = vmatprep.subr.bf16.mxu0 0
      %1916 = vmatpush1.bf16.msra.mxu0 %v1769
      %1917 = vmatprep.subr.bf16.mxu0 0
      %1918 = vmatpush1.bf16.msra.mxu0 %v1770
      %1919 = vmatprep.subr.bf16.mxu0 0
      %1920 = vmatpush1.bf16.msra.mxu0 %v1771
      %1921 = vmatprep.subr.bf16.mxu0 0
      %1922 = vmatpush1.bf16.msra.mxu0 %v1772
      %1923 = vmatprep.subr.bf16.mxu0 0
      %1924 = vmatpush1.bf16.msra.mxu0 0
      %1925 = vmatprep.subr.bf16.mxu0 0
      %1926 = vmatpush1.bf16.msra.mxu0 0
      %1927 = vmatprep.subr.bf16.mxu0 0
      %1928 = vmatpush1.bf16.msra.mxu0 0
      %1929 = vmatprep.subr.bf16.mxu0 0
      %1930 = vmatpush1.bf16.msra.mxu0 0
      %1931 = vmatprep.subr.bf16.mxu0 0
      %1932 = vmatpush1.bf16.msra.mxu0 0
      %1933 = vmatprep.subr.bf16.mxu0 0
      %1934 = vmatpush1.bf16.msra.mxu0 0
      %1935 = vmatprep.subr.bf16.mxu0 0
      %1936 = vmatpush1.bf16.msra.mxu0 0
      %1937 = vmatprep.subr.bf16.mxu0 0
      %1938 = vmatpush1.bf16.msra.mxu0 0
      %1939 = vmatprep.subr.bf16.mxu0 0
      %1940 = vmatpush1.bf16.msra.mxu0 0
      %1941 = vmatprep.subr.bf16.mxu0 0
      %1942 = vmatpush1.bf16.msra.mxu0 0
      %1943 = vmatprep.subr.bf16.mxu0 0
      %1944 = vmatpush1.bf16.msra.mxu0 0
      %1945 = vmatprep.subr.bf16.mxu0 0
      %1946 = vmatpush1.bf16.msra.mxu0 0
      %1947 = vmatprep.mubr.bf16.mxu0 0
      %1948 = vmatmul.mubr.bf16.gmra.mrb[0].mxu0 %v1904
      %v1949 = vpop.f32.mrb[0].mxu0
      %v1950 = vadd.f32 %v1853, %v1949
      %v1951 = vpop.f32.mrb[0].mxu0
      %v1952 = vpop.f32.mrb[0].mxu0
      %v1953 = vadd.f32 %v1856, %v1952
      %v1954 = vpop.f32.mrb[0].mxu0
      %1955 = vmatprep.mubr.bf16.mxu0 0
      %1956 = vmatmul.mubr.bf16.gmra.mrb[0].mxu0 %v1907
      %v1957 = vpop.f32.mrb[0].mxu0
      %v1958 = vadd.f32 %v1861, %v1957
      %v1959 = vpop.f32.mrb[0].mxu0
      %v1960 = vpop.f32.mrb[0].mxu0
      %v1961 = vadd.f32 %v1864, %v1960
      %v1962 = vpop.f32.mrb[0].mxu0
      %1963 = vmatprep.mubr.bf16.mxu0 0
      %1964 = vmatmul.mubr.bf16.gmra.mrb[0].mxu0 %v1910
      %v1965 = vpop.f32.mrb[0].mxu0
      %v1966 = vadd.f32 %v1869, %v1965
      %v1967 = vpop.f32.mrb[0].mxu0
      %v1968 = vpop.f32.mrb[0].mxu0
      %v1969 = vadd.f32 %v1872, %v1968
      %v1970 = vpop.f32.mrb[0].mxu0
      %1971 = vmatprep.mubr.bf16.mxu0 0
      %1972 = vmatmul.mubr.bf16.gmra.mrb[0].mxu0 %v1913
      %v1973 = vpop.f32.mrb[0].mxu0
      %v1974 = vadd.f32 %v1877, %v1973
      %v1975 = vpop.f32.mrb[0].mxu0
      %v1976 = vpop.f32.mrb[0].mxu0
      %v1977 = vadd.f32 %v1880, %v1976
      %v1978 = vpop.f32.mrb[0].mxu0
      %1979 = vdwg.mxu0
      %1980 = vset.pattern.permute.xlu0 2
      %1981 = vperm.xlu0 %1980, %v368
      %v1982 = vpop.permute.xlu0 %1981
      %1984 = vset.pattern.permute.xlu0 2
      %1985 = vperm.xlu0 %1984, %v369
      %v1986 = vpop.permute.xlu0 %1985
      %1988 = vset.pattern.permute.xlu0 2
      %1989 = vperm.xlu0 %1988, %v370
      %v1990 = vpop.permute.xlu0 %1989
      %1992 = vset.pattern.permute.xlu0 2
      %1993 = vperm.xlu0 %1992, %v371
      %v1994 = vpop.permute.xlu0 %1993
      %1996 = vset.pattern.permute.xlu0 2
      %1997 = vperm.xlu0 %1996, %v372
      %v1998 = vpop.permute.xlu0 %1997
      %2000 = vset.pattern.permute.xlu0 2
      %2001 = vperm.xlu0 %2000, %v373
      %v2002 = vpop.permute.xlu0 %2001
      %2004 = vset.pattern.permute.xlu0 2
      %2005 = vperm.xlu0 %2004, %v374
      %v2006 = vpop.permute.xlu0 %2005
      %2008 = vset.pattern.permute.xlu0 2
      %2009 = vperm.xlu0 %2008, %v375
      %v2010 = vpop.permute.xlu0 %2009
      %v2012 = vadd.f32 %v1950, %v1982
      %v2013 = vadd.f32 %v1953, %v1986
      %v2014 = vadd.f32 %v1958, %v1990
      %v2015 = vadd.f32 %v1961, %v1994
      %v2016 = vadd.f32 %v1966, %v1998
      %v2017 = vadd.f32 %v1969, %v2002
      %v2018 = vadd.f32 %v1974, %v2006
      %v2019 = vadd.f32 %v1977, %v2010
      %v2020 = vld [vmem:[%s4] sm:$0xf]
      %v2021 = vld [vmem:[%s4 + $0x4] sm:$0xf]
      %v2022 = vld [vmem:[%s4 + $0x8] sm:$0xf]
      %v2023 = vld [vmem:[%s4 + $0xc] sm:$0xf]
      %v2024 = vld [vmem:[%s4 + $0x10] sm:$0xf]
      %v2025 = vld [vmem:[%s4 + $0x14] sm:$0xf]
      %v2026 = vld [vmem:[%s4 + $0x18] sm:$0xf]
      %v2027 = vld [vmem:[%s4 + $0x1c] sm:$0xf]
      %v2028 = vld [vmem:[%s4 + $0x20] sm:$0xf]
      %v2029 = vld [vmem:[%s4 + $0x24] sm:$0xf]
      %v2030 = vld [vmem:[%s4 + $0x28] sm:$0xf]
      %v2031 = vld [vmem:[%s4 + $0x2c] sm:$0xf]
      %v2032 = vld [vmem:[%s4 + $0x30] sm:$0xf]
      %v2033 = vld [vmem:[%s4 + $0x34] sm:$0xf]
      %v2034 = vld [vmem:[%s4 + $0x38] sm:$0xf]
      %v2035 = vld [vmem:[%s4 + $0x3c] sm:$0xf]
      %v2036 = vld [vmem:[%s4 + $0x40] sm:$0xf]
      %v2037 = vld [vmem:[%s4 + $0x44] sm:$0xf]
      %v2038 = vld [vmem:[%s4 + $0x48] sm:$0xf]
      %v2039 = vld [vmem:[%s4 + $0x4c] sm:$0xf]
      %v2040 = vld [vmem:[%s4 + $0x50] sm:$0xf]
      %v2041 = vld [vmem:[%s4 + $0x54] sm:$0xf]
      %v2042 = vld [vmem:[%s4 + $0x58] sm:$0xf]
      %v2043 = vld [vmem:[%s4 + $0x5c] sm:$0xf]
      %v2044 = vld [vmem:[%s4 + $0x60] sm:$0xf]
      %v2045 = vld [vmem:[%s4 + $0x64] sm:$0xf]
      %v2046 = vld [vmem:[%s4 + $0x68] sm:$0xf]
      %v2047 = vld [vmem:[%s4 + $0x6c] sm:$0xf]
      %v2048 = vld [vmem:[%s4 + $0x70] sm:$0xf]
      %v2049 = vld [vmem:[%s4 + $0x74] sm:$0xf]
      %v2050 = vld [vmem:[%s4 + $0x78] sm:$0xf]
      %v2051 = vld [vmem:[%s4 + $0x7c] sm:$0xf]
      %v2084 = vunpack.c.l.b16 %v2020
      %v2085 = vunpack.c.l.b16 %v2021
      %v2086 = vunpack.c.l.b16 %v2022
      %v2087 = vunpack.c.l.b16 %v2023
      %v2088 = vunpack.c.l.b16 %v2024
      %v2089 = vunpack.c.l.b16 %v2025
      %v2090 = vunpack.c.l.b16 %v2026
      %v2091 = vunpack.c.l.b16 %v2027
      %v2092 = vunpack.c.l.b16 %v2028
      %v2093 = vunpack.c.l.b16 %v2029
      %v2094 = vunpack.c.l.b16 %v2030
      %v2095 = vunpack.c.l.b16 %v2031
      %v2096 = vunpack.c.l.b16 %v2032
      %v2097 = vunpack.c.l.b16 %v2033
      %v2098 = vunpack.c.l.b16 %v2034
      %v2099 = vunpack.c.l.b16 %v2035
      %v2100 = vunpack.c.l.b16 %v2036
      %v2101 = vunpack.c.l.b16 %v2037
      %v2102 = vunpack.c.l.b16 %v2038
      %v2103 = vunpack.c.l.b16 %v2039
      %v2104 = vunpack.c.l.b16 %v2040
      %v2105 = vunpack.c.l.b16 %v2041
      %v2106 = vunpack.c.l.b16 %v2042
      %v2107 = vunpack.c.l.b16 %v2043
      %v2108 = vunpack.c.l.b16 %v2044
      %v2109 = vunpack.c.l.b16 %v2045
      %v2110 = vunpack.c.l.b16 %v2046
      %v2111 = vunpack.c.l.b16 %v2047
      %v2112 = vunpack.c.l.b16 %v2048
      %v2113 = vunpack.c.l.b16 %v2049
      %v2114 = vunpack.c.l.b16 %v2050
      %v2115 = vunpack.c.l.b16 %v2051
      %v2116 = vpack.c.b16 %v2085, %v2084
      %v2117 = vpack.c.b16 %v2087, %v2086
      %v2118 = vpack.c.b16 %v2089, %v2088
      %v2119 = vpack.c.b16 %v2091, %v2090
      %v2120 = vpack.c.b16 %v2093, %v2092
      %v2121 = vpack.c.b16 %v2095, %v2094
      %v2122 = vpack.c.b16 %v2097, %v2096
      %v2123 = vpack.c.b16 %v2099, %v2098
      %v2124 = vpack.c.b16 %v2101, %v2100
      %v2125 = vpack.c.b16 %v2103, %v2102
      %v2126 = vpack.c.b16 %v2105, %v2104
      %v2127 = vpack.c.b16 %v2107, %v2106
      %v2128 = vpack.c.b16 %v2109, %v2108
      %v2129 = vpack.c.b16 %v2111, %v2110
      %v2130 = vpack.c.b16 %v2113, %v2112
      %v2131 = vpack.c.b16 %v2115, %v2114
      %2148 = vmatprep.subr.bf16.mxu0 0
      %2149 = vmatpush1.bf16.msra.mxu0 %v2116
      %2150 = vmatprep.subr.bf16.mxu0 0
      %2151 = vmatpush1.bf16.msra.mxu0 %v2117
      %2152 = vmatprep.subr.bf16.mxu0 0
      %2153 = vmatpush1.bf16.msra.mxu0 %v2118
      %2154 = vmatprep.subr.bf16.mxu0 0
      %2155 = vmatpush1.bf16.msra.mxu0 %v2119
      %2156 = vmatprep.subr.bf16.mxu0 0
      %2157 = vmatpush1.bf16.msra.mxu0 %v2120
      %2158 = vmatprep.subr.bf16.mxu0 0
      %2159 = vmatpush1.bf16.msra.mxu0 %v2121
      %2160 = vmatprep.subr.bf16.mxu0 0
      %2161 = vmatpush1.bf16.msra.mxu0 %v2122
      %2162 = vmatprep.subr.bf16.mxu0 0
      %2163 = vmatpush1.bf16.msra.mxu0 %v2123
      %2164 = vmatprep.subr.bf16.mxu0 0
      %2165 = vmatpush1.bf16.msra.mxu0 %v2124
      %2166 = vmatprep.subr.bf16.mxu0 0
      %2167 = vmatpush1.bf16.msra.mxu0 %v2125
      %2168 = vmatprep.subr.bf16.mxu0 0
      %2169 = vmatpush1.bf16.msra.mxu0 %v2126
      %2170 = vmatprep.subr.bf16.mxu0 0
      %2171 = vmatpush1.bf16.msra.mxu0 %v2127
      %2172 = vmatprep.subr.bf16.mxu0 0
      %2173 = vmatpush1.bf16.msra.mxu0 %v2128
      %2174 = vmatprep.subr.bf16.mxu0 0
      %2175 = vmatpush1.bf16.msra.mxu0 %v2129
      %2176 = vmatprep.subr.bf16.mxu0 0
      %2177 = vmatpush1.bf16.msra.mxu0 %v2130
      %2178 = vmatprep.subr.bf16.mxu0 0
      %2179 = vmatpush1.bf16.msra.mxu0 %v2131
      %2180 = vmatprep.mubr.bf16.mxu0 %v1367
      %2181 = vmatmul.mubr.bf16.gmra.mrb[0].mxu0 %v1366
      %v2182 = vpop.f32.mrb[0].mxu0
      %v2183 = vadd.f32 0.0, %v2182
      %v2184 = vpop.f32.mrb[0].mxu0
      %v2185 = vpop.f32.mrb[0].mxu0
      %v2186 = vadd.f32 0.0, %v2185
      %v2187 = vpop.f32.mrb[0].mxu0
      %2188 = vmatprep.mubr.bf16.mxu0 %v1369
      %2189 = vmatmul.mubr.bf16.gmra.mrb[0].mxu0 %v1368
      %v2190 = vpop.f32.mrb[0].mxu0
      %v2191 = vadd.f32 0.0, %v2190
      %v2192 = vpop.f32.mrb[0].mxu0
      %v2193 = vpop.f32.mrb[0].mxu0
      %v2194 = vadd.f32 0.0, %v2193
      %v2195 = vpop.f32.mrb[0].mxu0
      %2196 = vmatprep.mubr.bf16.mxu0 %v1371
      %2197 = vmatmul.mubr.bf16.gmra.mrb[0].mxu0 %v1370
      %v2198 = vpop.f32.mrb[0].mxu0
      %v2199 = vadd.f32 0.0, %v2198
      %v2200 = vpop.f32.mrb[0].mxu0
      %v2201 = vpop.f32.mrb[0].mxu0
      %v2202 = vadd.f32 0.0, %v2201
      %v2203 = vpop.f32.mrb[0].mxu0
      %2204 = vmatprep.mubr.bf16.mxu0 %v1373
      %2205 = vmatmul.mubr.bf16.gmra.mrb[0].mxu0 %v1372
      %v2206 = vpop.f32.mrb[0].mxu0
      %v2207 = vadd.f32 0.0, %v2206
      %v2208 = vpop.f32.mrb[0].mxu0
      %v2209 = vpop.f32.mrb[0].mxu0
      %v2210 = vadd.f32 0.0, %v2209
      %v2211 = vpop.f32.mrb[0].mxu0
      %2212 = vdwg.mxu0
      %2213 = vst [vmem:[%s325] sm:$0xff] %v2012
      %2214 = vst [vmem:[%s325 + $0x10] sm:$0xff] %v2013
      %2215 = vst [vmem:[%s325 + $0x20] sm:$0xff] %v2014
      %2216 = vst [vmem:[%s325 + $0x30] sm:$0xff] %v2015
      %2217 = vst [vmem:[%s325 + $0x40] sm:$0xff] %v2016
      %2218 = vst [vmem:[%s325 + $0x50] sm:$0xff] %v2017
      %2219 = vst [vmem:[%s325 + $0x60] sm:$0xff] %v2018
      %2220 = vst [vmem:[%s325 + $0x70] sm:$0xff] %v2019
      %vm2221 = vcmask 130048
      %2222 = vst.msk [vmem:[%s325 + $0x8] sm:$0xff] %vm2221, %v2183
      %2223 = vst.msk [vmem:[%s325 + $0x18] sm:$0xff] %vm2221, %v2186
      %2224 = vst.msk [vmem:[%s325 + $0x28] sm:$0xff] %vm2221, %v2191
      %2225 = vst.msk [vmem:[%s325 + $0x38] sm:$0xff] %vm2221, %v2194
      %2226 = vst.msk [vmem:[%s325 + $0x48] sm:$0xff] %vm2221, %v2199
      %2227 = vst.msk [vmem:[%s325 + $0x58] sm:$0xff] %vm2221, %v2202
      %2228 = vst.msk [vmem:[%s325 + $0x68] sm:$0xff] %vm2221, %v2207
      %2229 = vst.msk [vmem:[%s325 + $0x78] sm:$0xff] %vm2221, %v2210
      %p2230 = scmp.lt.s32.totalorder %s19, 1
      %s2231 = scalar_select %p2230, %s19, 1
      %s2232 = smul.addr %s2231, 16
      %s2233 = smul.addr %s2232, 8
      %s2234 = scalar_lea.vmem %s8, %s2233
      // Predicated region
      $region53: #{gcapcn_forward.1} parent=51 // pred_check
        %p2235 = pneg %p215
      $region54: #{gcapcn_forward.1} parent=51 // pred_check_branch
        %2237 = sbr.rel (%p2235) target = $region56
      $region55: #{gcapcn_forward.1} parent=51 // pred_region
        _
      $region56: #{gcapcn_forward.1} parent=51 // pred_fallthru
        _
    $region52: #{gcapcn_forward.1} parent=5 // pred_fallthru
      _
    %p2238 = scmp.le.s32.totalorder 2, %s14
    // Predicated region
    $region57: #{gcapcn_forward.1} parent=5 // pred_check
      %p2239 = pneg %p2238
    $region58: #{gcapcn_forward.1} parent=5 // pred_check_branch
      %2241 = sbr.rel (%p2239) target = $region60
    $region59: #{gcapcn_forward.1} parent=5 // pred_region
      %s2242 = ssub.s32 %s14, 2
      // Predicated region
      $region61: #{gcapcn_forward.1} parent=59 // pred_check
        %p2243 = pneg %p221
      $region62: #{gcapcn_forward.1} parent=59 // pred_check_branch
        %2245 = sbr.rel (%p2243) target = $region64
      $region63: #{gcapcn_forward.1} parent=59 // pred_region
        %p2246 = scmp.lt.s32.totalorder %s20, 1
        %s2247 = scalar_select %p2246, %s20, 1
        %s2248 = smul.addr %s2247, 16
        %s2249 = smul.addr %s2248, 8
        %s2250 = scalar_lea.vmem %s8, %s2249
      $region64: #{gcapcn_forward.1} parent=59 // pred_fallthru
        _
    $region60: #{gcapcn_forward.1} parent=5 // pred_fallthru
      _
  $region6: #{gcapcn_forward.1} parent=0 // loop_footer
    %s18 = sadd.s32 1, %s14
  $region7: #{gcapcn_forward.1} parent=0 // loop_footer_branch
    %13 = sbr.rel target = $region3
  $region8: #{gcapcn_forward.1} parent=0 // loop_exit
    _

</llo_original>
